<compile_context>
chip_gen: v5e
topology: v5e:2x2
jax: 0.10.0
libtpu: 0.0.40
codegen_flags: <defaults>
</compile_context>

<pallas_src>
import functools

import jax
import jax.numpy as jnp
from jax import lax
from jax.experimental import pallas as pl
from jax.experimental.pallas import tpu as pltpu


# --------------------------------------------------------------------------- #
# Kernel: one (batch, row-tile) step of fused nearest-2x upsample + 3x3 conv.
# --------------------------------------------------------------------------- #
def _upsample_conv_kernel(x_ref, v_ref, b_ref, o_ref, *, tile_h, height, width,
                          chan):
    # x_ref: (1, H, W, C)       unpadded NHWC input (resident across row tiles)
    # v_ref: (4, 4C, C)         combined per-phase weights, taps folded along K
    # b_ref: (1, C)             bias (f32)
    # o_ref: (1, 4, tile_h, W, C)  phase-major output tile (compute dtype)
    r0 = pl.program_id(1) * tile_h                       # first input row of tile

    # ---- build (tile_h + 2) padded rows in VMEM (halo fill, no wrapper pad) ----
    core = x_ref[0, pl.ds(pl.multiple_of(r0, tile_h), tile_h)]        # (tile_h,W,C)
    top = x_ref[0, pl.ds(jnp.maximum(r0 - 1, 0), 1)]                  # (1,W,C)
    bot = x_ref[0, pl.ds(jnp.minimum(r0 + tile_h, height - 1), 1)]    # (1,W,C)
    top = jnp.where(r0 == 0, jnp.zeros_like(top), top)
    bot = jnp.where(r0 + tile_h == height, jnp.zeros_like(bot), bot)
    xrows = jnp.concatenate([top, core, bot], axis=0)    # (tile_h+2, W, C)
    # xrows[i] == zero-padded row (r0 + i).

    # ---- 3 column-shifted variants (padded col offsets 0/1/2), built ONCE ----
    zcol = jnp.zeros((tile_h + 2, 1, chan), xrows.dtype)
    xc = (jnp.concatenate([zcol, xrows[:, :width - 1, :]], axis=1),   # pad col 0
          xrows,                                                      # pad col 1
          jnp.concatenate([xrows[:, 1:, :], zcol], axis=1))           # pad col 2
    # xc[c][i, x] == zero-padded pixel (row r0 + i, col x + c).

    # Bias broadcast hoisted out of the phase loop (JAX does not CSE it).
    bias = jnp.broadcast_to(b_ref[...].astype(jnp.float32),
                            (tile_h * width, chan))

    # ---- 4 phases: one (M, 4C) @ (4C, C) matmul each ----
    for py in range(2):
        for px in range(2):
            p = py * 2 + px
            # Tap order (dy, dx) = (0,0),(0,1),(1,0),(1,1) must match the weight
            # reshape (4, 4, C, C) -> (4, 4C, C) done in the wrapper.
            lhs = jnp.concatenate(
                [xc[px + dx][py + dy: py + dy + tile_h]
                 for dy in range(2) for dx in range(2)],
                axis=-1)                                  # (tile_h, W, 4C)
            acc = jnp.dot(lhs.reshape(tile_h * width, 4 * chan), v_ref[p],
                          preferred_element_type=jnp.float32)
            o_ref[0, p] = (acc + bias).reshape(tile_h, width, chan).astype(
                o_ref.dtype)


# --------------------------------------------------------------------------- #
# Weight preprocessing: fold "conv of nearest-upsampled" into per-phase 2x2 taps.
#   out[2y+py, 2x+px] = sum_{dy,dx in {0,1}} Xpad[y+py+dy, x+px+dx] @ V[py,px,dy,dx]
#   V[py,px,dy,dx] = sum_{ky in S(py,dy), kx in S(px,dx)} w[ky,kx]
#   S(0,0)={0}, S(0,1)={1,2}, S(1,0)={0,1}, S(1,1)={2}
# --------------------------------------------------------------------------- #
def _combine_phase_weights(w_hwio):
    S = (((0,), (1, 2)), ((0, 1), (2,)))
    phases = []
    for py in range(2):
        for px in range(2):
            taps = []
            for dy in range(2):
                for dx in range(2):
                    m = sum(w_hwio[ky, kx]
                            for ky in S[py][dy] for kx in S[px][dx])
                    taps.append(m)
            phases.append(jnp.stack(taps))
    return jnp.stack(phases)                               # (4, 4, Cin, Cout)


# --------------------------------------------------------------------------- #
# VMEM sizing (generation-aware, counts Pallas double-buffering honestly).
# --------------------------------------------------------------------------- #
def _round_up(x, m):
    return (x + m - 1) // m * m


def _vmem_capacity_bytes():
    try:
        cap = getattr(pltpu.get_tpu_info(), "vmem_capacity_bytes", None)
        if cap:
            return int(cap)
    except Exception:
        pass
    return 64 * 1024 * 1024          # conservative fallback (v7x per-core)


def _pick_tile_h(h, w, c, in_esize, out_esize, budget_bytes):
    # Pallas double-buffers every auto-pipelined block -> count 2x for all of them.
    fixed = 2 * (h * w * c * in_esize            # input image block (1,H,W,C)
                 + 4 * 4 * c * c * in_esize      # combined weights (4,4C,C)
                 + 4 * c)                        # bias (f32)
    for th in range(h, 0, -1):
        if h % th:
            continue
        out_tile = 2 * 4 * th * w * c * out_esize          # output tile, 2 bufs
        temps = (3 * (th + 2) * w * c * in_esize           # xc0/xc1/xc2
                 + 4 * th * w * c * in_esize                # K-concat LHS
                 + 2 * th * w * c * 4)                      # f32 acc + bias bcast
        if fixed + out_tile + temps <= budget_bytes:
            return th
    raise ValueError(
        "UpSample Pallas kernel: no row tile fits the VMEM budget "
        f"({budget_bytes} bytes) for H={h}, W={w}, C={c}. "
        "Switch the input to a row-windowed halo block (pl.ANY + manual DMA) "
        "for images this large.")


# --------------------------------------------------------------------------- #
# Public wrapper: NCHW in / NCHW out, weight in HWIO (3, 3, C, C), bias (C,).
# (PyTorch OIHW weights convert via w.transpose(2, 3, 1, 0).)
# --------------------------------------------------------------------------- #
@functools.partial(
    jax.jit,
    static_argnames=("tile_h", "cpad", "compute_dtype", "out_dtype",
                     "vmem_limit"))
def _upsample_call(x_nchw, w_hwio, b, *, tile_h, cpad, compute_dtype, out_dtype,
                   vmem_limit):
    bsz, c, h, w = x_nchw.shape
    n_t = h // tile_h

    # Only wrapper-side input pass: NCHW -> NHWC + cast (pad folded into kernel).
    x = jnp.transpose(x_nchw, (0, 2, 3, 1)).astype(compute_dtype)     # (B,H,W,C)
    if cpad != c:                              # keep lane-dense stores (C % 128)
        x = jnp.pad(x, ((0, 0), (0, 0), (0, 0), (0, cpad - c)))
        w_hwio = jnp.pad(w_hwio, ((0, 0), (0, 0), (0, cpad - c), (0, cpad - c)))
        b = jnp.pad(b, ((0, cpad - c),))

    # Combine taps in f32, fold the 4 taps along K: (4, 4, C, C) -> (4, 4C, C).
    v = _combine_phase_weights(w_hwio.astype(jnp.float32))
    v = v.reshape(4, 4 * cpad, cpad).astype(compute_dtype)
    bias = b.astype(jnp.float32).reshape(1, cpad)

    kernel = functools.partial(_upsample_conv_kernel, tile_h=tile_h, height=h,
                               width=w, chan=cpad)
    out = pl.pallas_call(
        kernel,
        out_shape=jax.ShapeDtypeStruct((bsz, 4, h, w, cpad), out_dtype),
        grid=(bsz, n_t),
        in_specs=[
            # Whole (unpadded) image resident per batch; constant across row tiles.
            pl.BlockSpec((1, h, w, cpad), lambda bi, ti: (bi, 0, 0, 0)),
            pl.BlockSpec((4, 4 * cpad, cpad), lambda bi, ti: (0, 0, 0)),
            pl.BlockSpec((1, cpad), lambda bi, ti: (0, 0)),
        ],
        out_specs=pl.BlockSpec((1, 4, tile_h, w, cpad),
                               lambda bi, ti: (bi, 0, ti, 0, 0)),
        compiler_params=pltpu.CompilerParams(
            dimension_semantics=("parallel", "parallel"),
            vmem_limit_bytes=vmem_limit),
    )(x, v, bias)

    # (b, py, px, y, x, c) -> (b, c, y, py, x, px) -> NCHW (B, C, 2H, 2W).
    # The phase de-interleave rides on the one transpose we need anyway.
    out = out.reshape(bsz, 2, 2, h, w, cpad)
    out = jnp.transpose(out, (0, 5, 3, 1, 4, 2)).reshape(bsz, cpad, 2 * h, 2 * w)
    if cpad != c:
        out = out[:, :c]
    return out.astype(x_nchw.dtype)


def upsample_nearest2x_conv3x3(x_nchw, w_hwio, b, *, tile_h=None,
                               compute_dtype=jnp.bfloat16, out_dtype=None):
    bsz, c, h, w = x_nchw.shape
    assert w_hwio.shape == (3, 3, c, c) and b.shape == (c,)
    assert w >= 2, "kernel assumes width >= 2"
    if out_dtype is None:
        out_dtype = compute_dtype            # bf16 kernel output halves HBM bytes
    cpad = max(_round_up(c, 128), 128)

    cap = _vmem_capacity_bytes()
    budget = int(0.40 * cap)                 # headroom for compiler scratch
    vmem_limit = min(int(0.75 * cap), 100 * 1024 * 1024)
    in_es = jnp.dtype(compute_dtype).itemsize
    out_es = jnp.dtype(out_dtype).itemsize
    if tile_h is None:
        tile_h = _pick_tile_h(h, w, cpad, in_es, out_es, budget)
    assert h % tile_h == 0

    return _upsample_call(x_nchw, w_hwio, b, tile_h=tile_h, cpad=cpad,
                          compute_dtype=compute_dtype, out_dtype=out_dtype,
                          vmem_limit=vmem_limit)


# --------------------------------------------------------------------------- #
# Pure-JAX reference (mirrors the PyTorch forward).
# --------------------------------------------------------------------------- #
def ref_upsample(x_nchw, w_hwio, b):
    u = jnp.repeat(jnp.repeat(x_nchw, 2, axis=2), 2, axis=3)    # nearest 2x
    y = lax.conv_general_dilated(
        u, w_hwio, window_strides=(1, 1), padding=((1, 1), (1, 1)),
        dimension_numbers=("NCHW", "HWIO", "NCHW"))
    return y + b[None, :, None, None]


if __name__ == "__main__":
    B, C, H, W = 2, 128, 8, 8

    key = jax.random.PRNGKey(0)
    kx, kw, kb = jax.random.split(key, 3)
    x = jax.random.normal(kx, (B, C, H, W), jnp.float32)            # NCHW input
    w = 0.1 * jax.random.normal(kw, (3, 3, C, C), jnp.float32)      # HWIO weight
    b = 0.05 * jax.random.normal(kb, (C,), jnp.float32)

    ref = jax.block_until_ready(ref_upsample(x, w, b))

    # f32 compute path with 2 row tiles (exercises the in-VMEM halo masking).
    out_f32 = jax.block_until_ready(
        upsample_nearest2x_conv3x3(x, w, b, tile_h=4,
                                   compute_dtype=jnp.float32))
    assert out_f32.shape == (B, C, 2 * H, 2 * W)
    err_f32 = float(jnp.max(jnp.abs(out_f32 - ref)))
    assert err_f32 < 1e-2, err_f32

    # Default path: bf16 compute, bf16 phase-major output (f32 MXU accumulation).
    out_bf16 = jax.block_until_ready(upsample_nearest2x_conv3x3(x, w, b))
    assert out_bf16.shape == (B, C, 2 * H, 2 * W)
    assert jnp.allclose(out_bf16, ref, atol=1e-1, rtol=2e-2), float(
        jnp.max(jnp.abs(out_bf16 - ref)))

    print("KERNEL_OK")
</pallas_src>

<mosaic_0001>
module attributes {stable_mosaic.version = 11 : i64} {
  func.func @_upsample_conv_kernel(%arg0: i32, %arg1: i32, %arg2: memref<1x8x8x128xf32, #tpu.memory_space<vmem>>, %arg3: memref<4x512x128xf32, #tpu.memory_space<vmem>>, %arg4: memref<1x128xf32, #tpu.memory_space<vmem>>, %arg5: memref<1x4x4x8x128xf32, #tpu.memory_space<vmem>>) attributes {dimension_semantics = [#tpu.dimension_semantics<parallel>, #tpu.dimension_semantics<parallel>], iteration_bounds = array<i64: 2, 2>, scalar_prefetch = 0 : i64, scratch_operands = 0 : i64, tpu.core_type = #tpu.core_type<tc>, window_params = [{transform_indices = @transform_0, window_bounds = array<i64: 1, 8, 8, 128>}, {pipeline_mode = #tpu.pipeline_mode<synchronous>, transform_indices = @transform_1, window_bounds = array<i64: 4, 512, 128>}, {pipeline_mode = #tpu.pipeline_mode<synchronous>, transform_indices = @transform_2, window_bounds = array<i64: 1, 128>}, {transform_indices = @transform_3, window_bounds = array<i64: 1, 4, 4, 8, 128>}]} {
    %c4_i32 = arith.constant 4 : i32
    %0 = arith.muli %arg1, %c4_i32 : i32
    %1 = tpu.assume_multiple %0, 4 : i32
    %c0 = arith.constant 0 : index
    %2 = arith.index_cast %1 : i32 to index
    %c0_0 = arith.constant 0 : index
    %c0_1 = arith.constant 0 : index
    %3 = vector.load %arg2[%c0, %2, %c0_0, %c0_1] : memref<1x8x8x128xf32, #tpu.memory_space<vmem>>, vector<1x4x8x128xf32>
    %4 = vector.shape_cast %3 : vector<1x4x8x128xf32> to vector<4x8x128xf32>
    %c1_i32 = arith.constant 1 : i32
    %5 = arith.subi %0, %c1_i32 : i32
    %c0_i32 = arith.constant 0 : i32
    %6 = arith.maxsi %5, %c0_i32 : i32
    %c0_2 = arith.constant 0 : index
    %7 = arith.index_cast %6 : i32 to index
    %c0_3 = arith.constant 0 : index
    %c0_4 = arith.constant 0 : index
    %8 = vector.load %arg2[%c0_2, %7, %c0_3, %c0_4] : memref<1x8x8x128xf32, #tpu.memory_space<vmem>>, vector<1x1x8x128xf32>
    %9 = vector.shape_cast %8 : vector<1x1x8x128xf32> to vector<1x8x128xf32>
    %c4_i32_5 = arith.constant 4 : i32
    %10 = arith.addi %0, %c4_i32_5 : i32
    %c7_i32 = arith.constant 7 : i32
    %11 = arith.minsi %10, %c7_i32 : i32
    %c0_6 = arith.constant 0 : index
    %12 = arith.index_cast %11 : i32 to index
    %c0_7 = arith.constant 0 : index
    %c0_8 = arith.constant 0 : index
    %13 = vector.load %arg2[%c0_6, %12, %c0_7, %c0_8] : memref<1x8x8x128xf32, #tpu.memory_space<vmem>>, vector<1x1x8x128xf32>
    %14 = vector.shape_cast %13 : vector<1x1x8x128xf32> to vector<1x8x128xf32>
    %c0_i32_9 = arith.constant 0 : i32
    %15 = arith.cmpi eq, %0, %c0_i32_9 : i32
    %cst = arith.constant 0.000000e+00 : f32
    %16 = vector.broadcast %cst : f32 to vector<1x8x128xf32>
    %17 = arith.select %15, %16, %9 : vector<1x8x128xf32>
    %c4_i32_10 = arith.constant 4 : i32
    %18 = arith.addi %0, %c4_i32_10 : i32
    %c8_i32 = arith.constant 8 : i32
    %19 = arith.cmpi eq, %18, %c8_i32 : i32
    %cst_11 = arith.constant 0.000000e+00 : f32
    %20 = vector.broadcast %cst_11 : f32 to vector<1x8x128xf32>
    %21 = arith.select %19, %20, %14 : vector<1x8x128xf32>
    %22 = tpu.concatenate %17, %4, %21 in 0 : vector<1x8x128xf32>, vector<4x8x128xf32>, vector<1x8x128xf32> -> vector<6x8x128xf32>
    %cst_12 = arith.constant 0.000000e+00 : f32
    %23 = vector.broadcast %cst_12 : f32 to vector<6x1x128xf32>
    %24 = vector.extract_strided_slice %22 {offsets = [0, 0, 0], sizes = [6, 7, 128], strides = [1, 1, 1]} : vector<6x8x128xf32> to vector<6x7x128xf32>
    %25 = tpu.concatenate %23, %24 in 1 : vector<6x1x128xf32>, vector<6x7x128xf32> -> vector<6x8x128xf32>
    %26 = vector.extract_strided_slice %22 {offsets = [0, 1, 0], sizes = [6, 7, 128], strides = [1, 1, 1]} : vector<6x8x128xf32> to vector<6x7x128xf32>
    %27 = tpu.concatenate %26, %23 in 1 : vector<6x7x128xf32>, vector<6x1x128xf32> -> vector<6x8x128xf32>
    %c0_13 = arith.constant 0 : index
    %c0_14 = arith.constant 0 : index
    %28 = vector.load %arg4[%c0_13, %c0_14] : memref<1x128xf32, #tpu.memory_space<vmem>>, vector<1x128xf32>
    %29 = vector.shape_cast %28 : vector<1x128xf32> to vector<1x128xf32>
    %30 = vector.broadcast %29 : vector<1x128xf32> to vector<32x128xf32>
    %31 = vector.extract_strided_slice %25 {offsets = [0, 0, 0], sizes = [4, 8, 128], strides = [1, 1, 1]} : vector<6x8x128xf32> to vector<4x8x128xf32>
    %32 = vector.extract_strided_slice %22 {offsets = [0, 0, 0], sizes = [4, 8, 128], strides = [1, 1, 1]} : vector<6x8x128xf32> to vector<4x8x128xf32>
    %33 = vector.extract_strided_slice %25 {offsets = [1, 0, 0], sizes = [4, 8, 128], strides = [1, 1, 1]} : vector<6x8x128xf32> to vector<4x8x128xf32>
    %34 = vector.extract_strided_slice %22 {offsets = [1, 0, 0], sizes = [4, 8, 128], strides = [1, 1, 1]} : vector<6x8x128xf32> to vector<4x8x128xf32>
    %35 = tpu.concatenate %31, %32, %33, %34 in 2 : vector<4x8x128xf32>, vector<4x8x128xf32>, vector<4x8x128xf32>, vector<4x8x128xf32> -> vector<4x8x512xf32>
    %36 = vector.shape_cast %35 : vector<4x8x512xf32> to vector<32x512xf32>
    %c0_15 = arith.constant 0 : index
    %c0_16 = arith.constant 0 : index
    %c0_17 = arith.constant 0 : index
    %37 = vector.load %arg3[%c0_15, %c0_16, %c0_17] : memref<4x512x128xf32, #tpu.memory_space<vmem>>, vector<1x512x128xf32>
    %38 = vector.shape_cast %37 : vector<1x512x128xf32> to vector<512x128xf32>
    %cst_18 = arith.constant dense<0.000000e+00> : vector<32x128xf32>
    %39 = tpu.matmul %36, %38, %cst_18 {dimension_numbers = #tpu.dot_dimension_numbers<[1], [0], [0], [1], [0, 0, 1, 1], [], []>} : vector<32x512xf32>, vector<512x128xf32>, vector<32x128xf32> -> vector<32x128xf32>
    %40 = arith.addf %39, %30 : vector<32x128xf32>
    %41 = vector.shape_cast %40 : vector<32x128xf32> to vector<4x8x128xf32>
    %c0_19 = arith.constant 0 : index
    %c0_20 = arith.constant 0 : index
    %c0_21 = arith.constant 0 : index
    %c0_22 = arith.constant 0 : index
    %c0_23 = arith.constant 0 : index
    %42 = vector.load %arg5[%c0_19, %c0_20, %c0_21, %c0_22, %c0_23] : memref<1x4x4x8x128xf32, #tpu.memory_space<vmem>>, vector<1x1x4x8x128xf32>
    %43 = vector.shape_cast %42 : vector<1x1x4x8x128xf32> to vector<4x8x128xf32>
    %44 = vector.shape_cast %41 : vector<4x8x128xf32> to vector<1x1x4x8x128xf32>
    tpu.vector_store %arg5[%c0_19, %c0_20, %c0_21, %c0_22, %c0_23], %44 {strides = array<i32>} : memref<1x4x4x8x128xf32, #tpu.memory_space<vmem>>, vector<1x1x4x8x128xf32>,
    %45 = vector.extract_strided_slice %22 {offsets = [0, 0, 0], sizes = [4, 8, 128], strides = [1, 1, 1]} : vector<6x8x128xf32> to vector<4x8x128xf32>
    %46 = vector.extract_strided_slice %27 {offsets = [0, 0, 0], sizes = [4, 8, 128], strides = [1, 1, 1]} : vector<6x8x128xf32> to vector<4x8x128xf32>
    %47 = vector.extract_strided_slice %22 {offsets = [1, 0, 0], sizes = [4, 8, 128], strides = [1, 1, 1]} : vector<6x8x128xf32> to vector<4x8x128xf32>
    %48 = vector.extract_strided_slice %27 {offsets = [1, 0, 0], sizes = [4, 8, 128], strides = [1, 1, 1]} : vector<6x8x128xf32> to vector<4x8x128xf32>
    %49 = tpu.concatenate %45, %46, %47, %48 in 2 : vector<4x8x128xf32>, vector<4x8x128xf32>, vector<4x8x128xf32>, vector<4x8x128xf32> -> vector<4x8x512xf32>
    %50 = vector.shape_cast %49 : vector<4x8x512xf32> to vector<32x512xf32>
    %c1 = arith.constant 1 : index
    %c0_24 = arith.constant 0 : index
    %c0_25 = arith.constant 0 : index
    %51 = vector.load %arg3[%c1, %c0_24, %c0_25] : memref<4x512x128xf32, #tpu.memory_space<vmem>>, vector<1x512x128xf32>
    %52 = vector.shape_cast %51 : vector<1x512x128xf32> to vector<512x128xf32>
    %cst_26 = arith.constant dense<0.000000e+00> : vector<32x128xf32>
    %53 = tpu.matmul %50, %52, %cst_26 {dimension_numbers = #tpu.dot_dimension_numbers<[1], [0], [0], [1], [0, 0, 1, 1], [], []>} : vector<32x512xf32>, vector<512x128xf32>, vector<32x128xf32> -> vector<32x128xf32>
    %54 = arith.addf %53, %30 : vector<32x128xf32>
    %55 = vector.shape_cast %54 : vector<32x128xf32> to vector<4x8x128xf32>
    %c0_27 = arith.constant 0 : index
    %c1_28 = arith.constant 1 : index
    %c0_29 = arith.constant 0 : index
    %c0_30 = arith.constant 0 : index
    %c0_31 = arith.constant 0 : index
    %56 = vector.load %arg5[%c0_27, %c1_28, %c0_29, %c0_30, %c0_31] : memref<1x4x4x8x128xf32, #tpu.memory_space<vmem>>, vector<1x1x4x8x128xf32>
    %57 = vector.shape_cast %56 : vector<1x1x4x8x128xf32> to vector<4x8x128xf32>
    %58 = vector.shape_cast %55 : vector<4x8x128xf32> to vector<1x1x4x8x128xf32>
    tpu.vector_store %arg5[%c0_27, %c1_28, %c0_29, %c0_30, %c0_31], %58 {strides = array<i32>} : memref<1x4x4x8x128xf32, #tpu.memory_space<vmem>>, vector<1x1x4x8x128xf32>,
    %59 = vector.extract_strided_slice %25 {offsets = [1, 0, 0], sizes = [4, 8, 128], strides = [1, 1, 1]} : vector<6x8x128xf32> to vector<4x8x128xf32>
    %60 = vector.extract_strided_slice %22 {offsets = [1, 0, 0], sizes = [4, 8, 128], strides = [1, 1, 1]} : vector<6x8x128xf32> to vector<4x8x128xf32>
    %61 = vector.extract_strided_slice %25 {offsets = [2, 0, 0], sizes = [4, 8, 128], strides = [1, 1, 1]} : vector<6x8x128xf32> to vector<4x8x128xf32>
    %62 = vector.extract_strided_slice %22 {offsets = [2, 0, 0], sizes = [4, 8, 128], strides = [1, 1, 1]} : vector<6x8x128xf32> to vector<4x8x128xf32>
    %63 = tpu.concatenate %59, %60, %61, %62 in 2 : vector<4x8x128xf32>, vector<4x8x128xf32>, vector<4x8x128xf32>, vector<4x8x128xf32> -> vector<4x8x512xf32>
    %64 = vector.shape_cast %63 : vector<4x8x512xf32> to vector<32x512xf32>
    %c2 = arith.constant 2 : index
    %c0_32 = arith.constant 0 : index
    %c0_33 = arith.constant 0 : index
    %65 = vector.load %arg3[%c2, %c0_32, %c0_33] : memref<4x512x128xf32, #tpu.memory_space<vmem>>, vector<1x512x128xf32>
    %66 = vector.shape_cast %65 : vector<1x512x128xf32> to vector<512x128xf32>
    %cst_34 = arith.constant dense<0.000000e+00> : vector<32x128xf32>
    %67 = tpu.matmul %64, %66, %cst_34 {dimension_numbers = #tpu.dot_dimension_numbers<[1], [0], [0], [1], [0, 0, 1, 1], [], []>} : vector<32x512xf32>, vector<512x128xf32>, vector<32x128xf32> -> vector<32x128xf32>
    %68 = arith.addf %67, %30 : vector<32x128xf32>
    %69 = vector.shape_cast %68 : vector<32x128xf32> to vector<4x8x128xf32>
    %c0_35 = arith.constant 0 : index
    %c2_36 = arith.constant 2 : index
    %c0_37 = arith.constant 0 : index
    %c0_38 = arith.constant 0 : index
    %c0_39 = arith.constant 0 : index
    %70 = vector.load %arg5[%c0_35, %c2_36, %c0_37, %c0_38, %c0_39] : memref<1x4x4x8x128xf32, #tpu.memory_space<vmem>>, vector<1x1x4x8x128xf32>
    %71 = vector.shape_cast %70 : vector<1x1x4x8x128xf32> to vector<4x8x128xf32>
    %72 = vector.shape_cast %69 : vector<4x8x128xf32> to vector<1x1x4x8x128xf32>
    tpu.vector_store %arg5[%c0_35, %c2_36, %c0_37, %c0_38, %c0_39], %72 {strides = array<i32>} : memref<1x4x4x8x128xf32, #tpu.memory_space<vmem>>, vector<1x1x4x8x128xf32>,
    %73 = vector.extract_strided_slice %22 {offsets = [1, 0, 0], sizes = [4, 8, 128], strides = [1, 1, 1]} : vector<6x8x128xf32> to vector<4x8x128xf32>
    %74 = vector.extract_strided_slice %27 {offsets = [1, 0, 0], sizes = [4, 8, 128], strides = [1, 1, 1]} : vector<6x8x128xf32> to vector<4x8x128xf32>
    %75 = vector.extract_strided_slice %22 {offsets = [2, 0, 0], sizes = [4, 8, 128], strides = [1, 1, 1]} : vector<6x8x128xf32> to vector<4x8x128xf32>
    %76 = vector.extract_strided_slice %27 {offsets = [2, 0, 0], sizes = [4, 8, 128], strides = [1, 1, 1]} : vector<6x8x128xf32> to vector<4x8x128xf32>
    %77 = tpu.concatenate %73, %74, %75, %76 in 2 : vector<4x8x128xf32>, vector<4x8x128xf32>, vector<4x8x128xf32>, vector<4x8x128xf32> -> vector<4x8x512xf32>
    %78 = vector.shape_cast %77 : vector<4x8x512xf32> to vector<32x512xf32>
    %c3 = arith.constant 3 : index
    %c0_40 = arith.constant 0 : index
    %c0_41 = arith.constant 0 : index
    %79 = vector.load %arg3[%c3, %c0_40, %c0_41] : memref<4x512x128xf32, #tpu.memory_space<vmem>>, vector<1x512x128xf32>
    %80 = vector.shape_cast %79 : vector<1x512x128xf32> to vector<512x128xf32>
    %cst_42 = arith.constant dense<0.000000e+00> : vector<32x128xf32>
    %81 = tpu.matmul %78, %80, %cst_42 {dimension_numbers = #tpu.dot_dimension_numbers<[1], [0], [0], [1], [0, 0, 1, 1], [], []>} : vector<32x512xf32>, vector<512x128xf32>, vector<32x128xf32> -> vector<32x128xf32>
    %82 = arith.addf %81, %30 : vector<32x128xf32>
    %83 = vector.shape_cast %82 : vector<32x128xf32> to vector<4x8x128xf32>
    %c0_43 = arith.constant 0 : index
    %c3_44 = arith.constant 3 : index
    %c0_45 = arith.constant 0 : index
    %c0_46 = arith.constant 0 : index
    %c0_47 = arith.constant 0 : index
    %84 = vector.load %arg5[%c0_43, %c3_44, %c0_45, %c0_46, %c0_47] : memref<1x4x4x8x128xf32, #tpu.memory_space<vmem>>, vector<1x1x4x8x128xf32>
    %85 = vector.shape_cast %84 : vector<1x1x4x8x128xf32> to vector<4x8x128xf32>
    %86 = vector.shape_cast %83 : vector<4x8x128xf32> to vector<1x1x4x8x128xf32>
    tpu.vector_store %arg5[%c0_43, %c3_44, %c0_45, %c0_46, %c0_47], %86 {strides = array<i32>} : memref<1x4x4x8x128xf32, #tpu.memory_space<vmem>>, vector<1x1x4x8x128xf32>,
    return
  }
  func.func @transform_0(%arg0: i32, %arg1: i32) -> (i32, i32, i32, i32) {
    %c0_i32 = arith.constant 0 : i32
    %c0_i32_0 = arith.constant 0 : i32
    %c0_i32_1 = arith.constant 0 : i32
    %c0_i32_2 = arith.constant 0 : i32
    return %arg0, %c0_i32, %c0_i32_0, %c0_i32_1 : i32, i32, i32, i32
  }
  func.func @transform_1(%arg0: i32, %arg1: i32) -> (i32, i32, i32) {
    %c0_i32 = arith.constant 0 : i32
    %c0_i32_0 = arith.constant 0 : i32
    %c0_i32_1 = arith.constant 0 : i32
    %c0_i32_2 = arith.constant 0 : i32
    return %c0_i32, %c0_i32_0, %c0_i32_1 : i32, i32, i32
  }
  func.func @transform_2(%arg0: i32, %arg1: i32) -> (i32, i32) {
    %c0_i32 = arith.constant 0 : i32
    %c0_i32_0 = arith.constant 0 : i32
    %c0_i32_1 = arith.constant 0 : i32
    return %c0_i32, %c0_i32_0 : i32, i32
  }
  func.func @transform_3(%arg0: i32, %arg1: i32) -> (i32, i32, i32, i32, i32) {
    %c0_i32 = arith.constant 0 : i32
    %c0_i32_0 = arith.constant 0 : i32
    %c0_i32_1 = arith.constant 0 : i32
    %c0_i32_2 = arith.constant 0 : i32
    return %arg0, %c0_i32, %arg1, %c0_i32_0, %c0_i32_1 : i32, i32, i32, i32, i32
  }
}

</mosaic_0001>

<llo_original>
// kernel: _upsample_call.1
$region0: #{_upsample_call.1}
  #allocation0 [shape = 'u32[]', space=smem, size = 0x4, offset = 0x4, fixed_abs, tag = 'smem constant byte address 0x4 - core index']
  #allocation1 [shape = 'u32[72,128]{1,0:T(1,128)}', space=vmem, size = 0x9000, scoped, tag = 'internal scratch']
  %s0 = inlined_call_operand.vmem [shape: f32[2,8,8,128], index: 0, kind: input, shape index: {}]
  %s1 = inlined_call_operand.vmem [shape: f32[4,512,128], index: 1, kind: input, shape index: {}]
  %s2 = inlined_call_operand.vmem [shape: f32[1,128], index: 2, kind: input, shape index: {}]
  %s3 = inlined_call_operand.vmem [shape: f32[2,4,8,8,128], index: 3, kind: output, shape index: {}]
  %s4 = sld [smem:[#allocation0]]
  $region79: #{_upsample_call.1} parent=0
    _
  %s6 = ssub.s32 1, %s4
  %s7 = scalar_select 0, %s6, %s4
  $region1: #{_upsample_call.1} parent=0
    #allocation2 [shape = 'u8[131072]{0}', space=vmem, size = 0x20000, scoped, tag = 'output window, operand 0']
    loop: start=0, step=1, limit=6
    $region2: #{_upsample_call.1} parent=1 // loop_pre_header
      _
    $region3: #{_upsample_call.1} parent=1 // loop_header
      %s9 = sphi 0, %s13
      %p10 = scmp.ge.s32.totalorder %s9, 6
      %s16 = sphi 0, %s28
      %s17 = sphi 0, %s24
      %s18 = sphi 0, %s16
      %s19 = sphi 0, %s17
      %s20 = sphi 0, %s18
      %s21 = sphi 0, %s19
      %s31 = sphi 0, %s33
      %s34 = sphi 0, %s31
      %s35 = sphi 0, %s34
      %s51 = sphi 0, %s35
      %s55 = sphi 0, %s55
      %s57 = sphi 0, %s55
      %s58 = sphi 0, %s57
      %s72 = sphi 0, %s58
      %s76 = sphi 0, %s76
      %s78 = sphi 0, %s76
      %s79 = sphi 0, %s78
      %s93 = sphi 0, %s79
      %s101 = sphi 0, %s103
      %s104 = sphi 0, %s101
      %s105 = sphi 0, %s104
      %s121 = sphi 0, %s105
    $region4: #{_upsample_call.1} parent=1 // loop_header_branch
      %12 = sbr.rel (%p10) target = $region8
    $region5: #{_upsample_call.1} parent=1 // loop_body
      %s14 = ssub.s32 %s9, 1
      %s15 = ssub.s32 %s9, 2
      %s22 = sadd.s32 1, %s17
      %p23 = scmp.ge.s32.totalorder %s22, 2
      %s24 = scalar_select %p23, 0, %s22
      %s25 = sadd.s32 1, %s16
      %s26 = scalar_select %p23, %s25, %s16
      %p27 = scmp.ge.s32.totalorder %s26, 2
      %s28 = scalar_select %p27, 0, %s26
      %s29 = ssub.s32 %s16, %s28
      %p30 = scmp.eq.s32.totalorder %s29, 0
      %s32 = sadd.s32 %s31, 1
      %s33 = scalar_select %p30, %s31, %s32
      %p36 = pneg %p30
      %p37 = scmp.eq.s32.totalorder %s9, 3
      %p38 = por %p36, %p37
      %p39 = scmp.ne.s32.totalorder %s31, %s34
      %p40 = scmp.eq.s32.totalorder %s9, 0
      %p41 = por %p39, %p40
      %p42 = scmp.ne.s32.totalorder %s31, %s34
      %p43 = scmp.eq.s32.totalorder %s14, 3
      %p44 = por %p42, %p43
      %p45 = scmp.ne.s32.totalorder %s34, %s35
      %p46 = scmp.eq.s32.totalorder %s14, 0
      %p47 = por %p45, %p46
      %p48 = scmp.ne.s32.totalorder %s34, %s35
      %p49 = scmp.eq.s32.totalorder %s15, 3
      %p50 = por %p48, %p49
      %p52 = scmp.ne.s32.totalorder %s35, %s51
      %p53 = scmp.eq.s32.totalorder %s15, 0
      %p54 = por %p52, %p53
      %s56 = sadd.s32 %s55, 1
      %p59 = scmp.eq.s32.totalorder %s9, 3
      %p60 = scmp.ne.s32.totalorder %s55, %s57
      %p61 = scmp.eq.s32.totalorder %s9, 0
      %p62 = por %p60, %p61
      %p63 = scmp.ne.s32.totalorder %s55, %s57
      %p64 = scmp.eq.s32.totalorder %s14, 3
      %p65 = por %p63, %p64
      %p66 = scmp.ne.s32.totalorder %s57, %s58
      %p67 = scmp.eq.s32.totalorder %s14, 0
      %p68 = por %p66, %p67
      %p69 = scmp.ne.s32.totalorder %s57, %s58
      %p70 = scmp.eq.s32.totalorder %s15, 3
      %p71 = por %p69, %p70
      %p73 = scmp.ne.s32.totalorder %s58, %s72
      %p74 = scmp.eq.s32.totalorder %s15, 0
      %p75 = por %p73, %p74
      %s77 = sadd.s32 %s76, 1
      %p80 = scmp.eq.s32.totalorder %s9, 3
      %p81 = scmp.ne.s32.totalorder %s76, %s78
      %p82 = scmp.eq.s32.totalorder %s9, 0
      %p83 = por %p81, %p82
      %p84 = scmp.ne.s32.totalorder %s76, %s78
      %p85 = scmp.eq.s32.totalorder %s14, 3
      %p86 = por %p84, %p85
      %p87 = scmp.ne.s32.totalorder %s78, %s79
      %p88 = scmp.eq.s32.totalorder %s14, 0
      %p89 = por %p87, %p88
      %p90 = scmp.ne.s32.totalorder %s78, %s79
      %p91 = scmp.eq.s32.totalorder %s15, 3
      %p92 = por %p90, %p91
      %p94 = scmp.ne.s32.totalorder %s79, %s93
      %p95 = scmp.eq.s32.totalorder %s15, 0
      %p96 = por %p94, %p95
      %s97 = ssub.s32 %s16, %s28
      %s98 = ssub.s32 %s17, %s24
      %s99 = sor.u32 %s97, %s98
      %p100 = scmp.eq.s32.totalorder %s99, 0
      %s102 = sadd.s32 %s101, 1
      %s103 = scalar_select %p100, %s101, %s102
      %p106 = pneg %p100
      %p107 = scmp.eq.s32.totalorder %s9, 3
      %p108 = por %p106, %p107
      %p109 = scmp.ne.s32.totalorder %s101, %s104
      %p110 = scmp.eq.s32.totalorder %s9, 0
      %p111 = por %p109, %p110
      %p112 = scmp.ne.s32.totalorder %s101, %s104
      %p113 = scmp.eq.s32.totalorder %s14, 3
      %p114 = por %p112, %p113
      %p115 = scmp.ne.s32.totalorder %s104, %s105
      %p116 = scmp.eq.s32.totalorder %s14, 0
      %p117 = por %p115, %p116
      %p118 = scmp.ne.s32.totalorder %s104, %s105
      %p119 = scmp.eq.s32.totalorder %s15, 3
      %p120 = por %p118, %p119
      %p122 = scmp.ne.s32.totalorder %s105, %s121
      %p123 = scmp.eq.s32.totalorder %s15, 0
      %p124 = por %p122, %p123
      %p125 = scmp.le.s32.totalorder 1, %s9
      %p126 = scmp.lt.s32.totalorder %s9, 5
      %p127 = pnand %p125, %p126
      %p128 = pneg %p127
      // Predicated region
      $region9: #{_upsample_call.1} parent=5 // pred_check
        _
      $region10: #{_upsample_call.1} parent=5 // pred_check_branch
        %130 = sbr.rel (%p127) target = $region12
      $region11: #{_upsample_call.1} parent=5 // pred_region
        %s131 = ssub.s32 %s9, 1
        // Predicated region
        $region13: #{_upsample_call.1} parent=11 // pred_check
          %p132 = pneg %p68
        $region14: #{_upsample_call.1} parent=11 // pred_check_branch
          %134 = sbr.rel (%p132) target = $region16
        $region15: #{_upsample_call.1} parent=11 // pred_region
          _
        $region16: #{_upsample_call.1} parent=11 // pred_fallthru
          _
        // Predicated region
        $region17: #{_upsample_call.1} parent=11 // pred_check
          %p135 = pneg %p89
        $region18: #{_upsample_call.1} parent=11 // pred_check_branch
          %137 = sbr.rel (%p135) target = $region20
        $region19: #{_upsample_call.1} parent=11 // pred_region
          _
        $region20: #{_upsample_call.1} parent=11 // pred_fallthru
          _
      $region12: #{_upsample_call.1} parent=5 // pred_fallthru
        _
      %p138 = scmp.lt.s32.totalorder %s9, 4
      // Predicated region
      $region21: #{_upsample_call.1} parent=5 // pred_check
        %p139 = pneg %p138
      $region22: #{_upsample_call.1} parent=5 // pred_check_branch
        %141 = sbr.rel (%p139) target = $region24
      $region23: #{_upsample_call.1} parent=5 // pred_region
        // Predicated region
        $region25: #{_upsample_call.1} parent=23 // pred_check
          %p142 = pneg %p41
        $region26: #{_upsample_call.1} parent=23 // pred_check_branch
          %144 = sbr.rel (%p142) target = $region28
        $region27: #{_upsample_call.1} parent=23 // pred_region
          %p145 = scmp.lt.s32.totalorder %s16, 1
          %s146 = scalar_select %p145, %s16, 1
          %s147 = smul.addr %s146, 8
          %s148 = smul.addr %s147, 8
          %s149 = scalar_lea.vmem %s0, %s148
        $region28: #{_upsample_call.1} parent=23 // pred_fallthru
          _
      $region24: #{_upsample_call.1} parent=5 // pred_fallthru
        _
      %p150 = scmp.le.s32.totalorder 1, %s9
      %p151 = scmp.lt.s32.totalorder %s9, 5
      %p152 = pnand %p150, %p151
      %p153 = pneg %p152
      // Predicated region
      $region29: #{_upsample_call.1} parent=5 // pred_check
        _
      $region30: #{_upsample_call.1} parent=5 // pred_check_branch
        %155 = sbr.rel (%p152) target = $region32
      $region31: #{_upsample_call.1} parent=5 // pred_region
        %s156 = ssub.s32 %s9, 1
        %p157 = scmp.lt.s32.totalorder %s18, 1
        %s158 = scalar_select %p157, %s18, 1
        %s159 = smul.addr %s158, 8
        %s160 = smul.addr %s159, 8
        %s161 = scalar_lea.vmem %s0, %s160
        %p162 = pneg %p47
        %p163 = pneg %p44
        %p164 = pneg %p68
        %p165 = pneg %p65
        %p166 = pneg %p89
        %p167 = pneg %p86
        %p168 = pneg %p117
        %p169 = pneg %p114
        %s170 = sand.u32 %s104, 1
        %s171 = sand.u32 %s104, 1
        %s172 = smul.addr %s171, 128
        %s173 = scalar_lea.vmem [#allocation2], %s172
        %p174 = scmp.lt.s32.totalorder %s18, 1
        %s175 = scalar_select %p174, %s18, 1
        %s176 = smul.addr %s175, 8
        %s177 = smul.addr %s176, 8
        %s178 = scalar_lea.vmem %s0, %s177
        %s179 = smul.u32 4, %s19
        %s180 = smul.u32 %s19, 4
        %s181 = smul.u32 %s180, 8
        %s182 = scalar_lea.vmem %s178, %s181
        %v183 = vld [vmem:[%s182] sm:$0xff]
        %v184 = vld [vmem:[%s182 + $0x8] sm:$0xff]
        %v185 = vld [vmem:[%s182 + $0x10] sm:$0xff]
        %v186 = vld [vmem:[%s182 + $0x18] sm:$0xff]
        %s187 = ssub.s32 %s180, 1
        %p188 = scmp.gt.s32.totalorder %s187, 0
        %s189 = scalar_select %p188, %s187, 0
        %s190 = smul.u32 %s189, 8
        %s191 = scalar_lea.vmem %s178, %s190
        %v192 = vld [vmem:[%s191] sm:$0xff]
        %s193 = sadd.s32 %s180, 4
        %p194 = scmp.lt.s32.totalorder %s193, 7
        %s195 = scalar_select %p194, %s193, 7
        %s196 = smul.u32 %s195, 8
        %s197 = scalar_lea.vmem %s178, %s196
        %v198 = vld [vmem:[%s197] sm:$0xff]
        %p199 = scmp.eq.s32.totalorder %s180, 0
        %s200 = scalar_select %p199, 1, 0
        %v201 = vstv %s200
        %vm202 = vcmp.eq.s32.totalorder %v201, 1
        %v203 = vsel %vm202, 0.0, %v192
        %p204 = scmp.eq.s32.totalorder %s193, 8
        %s205 = scalar_select %p204, 1, 0
        %v206 = vstv %s205
        %vm207 = vcmp.eq.s32.totalorder %v206, 1
        %v208 = vsel %vm207, 0.0, %v198
        %v215 = vrot.slane %v203, 7
        %v216 = vrot.slane %v183, 7
        %v217 = vrot.slane %v184, 7
        %v218 = vrot.slane %v185, 7
        %v219 = vrot.slane %v186, 7
        %v220 = vrot.slane %v208, 7
        %vm227 = vcmask 1040384
        %v228 = vsel %vm227, 0.0, %v215
        %v229 = vsel %vm227, 0.0, %v216
        %v230 = vsel %vm227, 0.0, %v217
        %v231 = vsel %vm227, 0.0, %v218
        %v232 = vsel %vm227, 0.0, %v219
        %v233 = vsel %vm227, 0.0, %v220
        %v234 = vrot.slane %v203, 1
        %v235 = vrot.slane %v183, 1
        %v236 = vrot.slane %v184, 1
        %v237 = vrot.slane %v185, 1
        %v238 = vrot.slane %v186, 1
        %v239 = vrot.slane %v208, 1
        %vm246 = vcmask 1046528
        %v247 = vsel %vm246, %v234, 0.0
        %v248 = vsel %vm246, %v235, 0.0
        %v249 = vsel %vm246, %v236, 0.0
        %v250 = vsel %vm246, %v237, 0.0
        %v251 = vsel %vm246, %v238, 0.0
        %v252 = vsel %vm246, %v239, 0.0
        %v253 = vld [vmem:[%s2] sm:$0x1]
        %v255 = vperm.slane %v253, 0
        %v257 = vld [vmem:[%s1] sm:$0xff]
        %v258 = vld [vmem:[%s1 + $0x8] sm:$0xff]
        %v259 = vld [vmem:[%s1 + $0x10] sm:$0xff]
        %v260 = vld [vmem:[%s1 + $0x18] sm:$0xff]
        %v261 = vld [vmem:[%s1 + $0x20] sm:$0xff]
        %v262 = vld [vmem:[%s1 + $0x28] sm:$0xff]
        %v263 = vld [vmem:[%s1 + $0x30] sm:$0xff]
        %v264 = vld [vmem:[%s1 + $0x38] sm:$0xff]
        %v265 = vld [vmem:[%s1 + $0x40] sm:$0xff]
        %v266 = vld [vmem:[%s1 + $0x48] sm:$0xff]
        %v267 = vld [vmem:[%s1 + $0x50] sm:$0xff]
        %v268 = vld [vmem:[%s1 + $0x58] sm:$0xff]
        %v269 = vld [vmem:[%s1 + $0x60] sm:$0xff]
        %v270 = vld [vmem:[%s1 + $0x68] sm:$0xff]
        %v271 = vld [vmem:[%s1 + $0x70] sm:$0xff]
        %v272 = vld [vmem:[%s1 + $0x78] sm:$0xff]
        %v273 = vld [vmem:[%s1 + $0x80] sm:$0xff]
        %v274 = vld [vmem:[%s1 + $0x88] sm:$0xff]
        %v275 = vld [vmem:[%s1 + $0x90] sm:$0xff]
        %v276 = vld [vmem:[%s1 + $0x98] sm:$0xff]
        %v277 = vld [vmem:[%s1 + $0xa0] sm:$0xff]
        %v278 = vld [vmem:[%s1 + $0xa8] sm:$0xff]
        %v279 = vld [vmem:[%s1 + $0xb0] sm:$0xff]
        %v280 = vld [vmem:[%s1 + $0xb8] sm:$0xff]
        %v281 = vld [vmem:[%s1 + $0xc0] sm:$0xff]
        %v282 = vld [vmem:[%s1 + $0xc8] sm:$0xff]
        %v283 = vld [vmem:[%s1 + $0xd0] sm:$0xff]
        %v284 = vld [vmem:[%s1 + $0xd8] sm:$0xff]
        %v285 = vld [vmem:[%s1 + $0xe0] sm:$0xff]
        %v286 = vld [vmem:[%s1 + $0xe8] sm:$0xff]
        %v287 = vld [vmem:[%s1 + $0xf0] sm:$0xff]
        %v288 = vld [vmem:[%s1 + $0xf8] sm:$0xff]
        %v289 = vld [vmem:[%s1 + $0x100] sm:$0xff]
        %v290 = vld [vmem:[%s1 + $0x108] sm:$0xff]
        %v291 = vld [vmem:[%s1 + $0x110] sm:$0xff]
        %v292 = vld [vmem:[%s1 + $0x118] sm:$0xff]
        %v293 = vld [vmem:[%s1 + $0x120] sm:$0xff]
        %v294 = vld [vmem:[%s1 + $0x128] sm:$0xff]
        %v295 = vld [vmem:[%s1 + $0x130] sm:$0xff]
        %v296 = vld [vmem:[%s1 + $0x138] sm:$0xff]
        %v297 = vld [vmem:[%s1 + $0x140] sm:$0xff]
        %v298 = vld [vmem:[%s1 + $0x148] sm:$0xff]
        %v299 = vld [vmem:[%s1 + $0x150] sm:$0xff]
        %v300 = vld [vmem:[%s1 + $0x158] sm:$0xff]
        %v301 = vld [vmem:[%s1 + $0x160] sm:$0xff]
        %v302 = vld [vmem:[%s1 + $0x168] sm:$0xff]
        %v303 = vld [vmem:[%s1 + $0x170] sm:$0xff]
        %v304 = vld [vmem:[%s1 + $0x178] sm:$0xff]
        %v305 = vld [vmem:[%s1 + $0x180] sm:$0xff]
        %v306 = vld [vmem:[%s1 + $0x188] sm:$0xff]
        %v307 = vld [vmem:[%s1 + $0x190] sm:$0xff]
        %v308 = vld [vmem:[%s1 + $0x198] sm:$0xff]
        %v309 = vld [vmem:[%s1 + $0x1a0] sm:$0xff]
        %v310 = vld [vmem:[%s1 + $0x1a8] sm:$0xff]
        %v311 = vld [vmem:[%s1 + $0x1b0] sm:$0xff]
        %v312 = vld [vmem:[%s1 + $0x1b8] sm:$0xff]
        %v313 = vld [vmem:[%s1 + $0x1c0] sm:$0xff]
        %v314 = vld [vmem:[%s1 + $0x1c8] sm:$0xff]
        %v315 = vld [vmem:[%s1 + $0x1d0] sm:$0xff]
        %v316 = vld [vmem:[%s1 + $0x1d8] sm:$0xff]
        %v317 = vld [vmem:[%s1 + $0x1e0] sm:$0xff]
        %v318 = vld [vmem:[%s1 + $0x1e8] sm:$0xff]
        %v319 = vld [vmem:[%s1 + $0x1f0] sm:$0xff]
        %v320 = vld [vmem:[%s1 + $0x1f8] sm:$0xff]
        %321 = vmatpush.msra.mxu0 %v272
        %322 = vmatpush.msra.mxu0 %v271
        %323 = vmatpush.msra.mxu0 %v270
        %324 = vmatpush.msra.mxu0 %v269
        %325 = vmatpush.msra.mxu0 %v268
        %326 = vmatpush.msra.mxu0 %v267
        %327 = vmatpush.msra.mxu0 %v266
        %328 = vmatpush.msra.mxu0 %v265
        %329 = vmatpush.msra.mxu0 %v264
        %330 = vmatpush.msra.mxu0 %v263
        %331 = vmatpush.msra.mxu0 %v262
        %332 = vmatpush.msra.mxu0 %v261
        %333 = vmatpush.msra.mxu0 %v260
        %334 = vmatpush.msra.mxu0 %v259
        %335 = vmatpush.msra.mxu0 %v258
        %336 = vmatpush.msra.mxu0 %v257
        %337 = vmatmul.f32.gmra.mxu0 %v228
        %v338 = vpop.f32.mrf.mxu0
        %v339 = vadd.f32 %v255, %v338
        %340 = vmatmul.f32.gmra.mxu0 %v229
        %v341 = vpop.f32.mrf.mxu0
        %v342 = vadd.f32 %v255, %v341
        %343 = vmatmul.f32.gmra.mxu0 %v230
        %v344 = vpop.f32.mrf.mxu0
        %v345 = vadd.f32 %v255, %v344
        %346 = vmatmul.f32.gmra.mxu0 %v231
        %v347 = vpop.f32.mrf.mxu0
        %v348 = vadd.f32 %v255, %v347
        %349 = vdwg.mxu0
        %350 = vmatpush.msra.mxu0 %v288
        %351 = vmatpush.msra.mxu0 %v287
        %352 = vmatpush.msra.mxu0 %v286
        %353 = vmatpush.msra.mxu0 %v285
        %354 = vmatpush.msra.mxu0 %v284
        %355 = vmatpush.msra.mxu0 %v283
        %356 = vmatpush.msra.mxu0 %v282
        %357 = vmatpush.msra.mxu0 %v281
        %358 = vmatpush.msra.mxu0 %v280
        %359 = vmatpush.msra.mxu0 %v279
        %360 = vmatpush.msra.mxu0 %v278
        %361 = vmatpush.msra.mxu0 %v277
        %362 = vmatpush.msra.mxu0 %v276
        %363 = vmatpush.msra.mxu0 %v275
        %364 = vmatpush.msra.mxu0 %v274
        %365 = vmatpush.msra.mxu0 %v273
        %366 = vmatmul.f32.gmra.mxu0 %v203
        %v367 = vpop.f32.mrf.mxu0
        %v368 = vadd.f32 %v339, %v367
        %369 = vmatmul.f32.gmra.mxu0 %v183
        %v370 = vpop.f32.mrf.mxu0
        %v371 = vadd.f32 %v342, %v370
        %372 = vmatmul.f32.gmra.mxu0 %v184
        %v373 = vpop.f32.mrf.mxu0
        %v374 = vadd.f32 %v345, %v373
        %375 = vmatmul.f32.gmra.mxu0 %v185
        %v376 = vpop.f32.mrf.mxu0
        %v377 = vadd.f32 %v348, %v376
        %378 = vdwg.mxu0
        %379 = vmatpush.msra.mxu0 %v304
        %380 = vmatpush.msra.mxu0 %v303
        %381 = vmatpush.msra.mxu0 %v302
        %382 = vmatpush.msra.mxu0 %v301
        %383 = vmatpush.msra.mxu0 %v300
        %384 = vmatpush.msra.mxu0 %v299
        %385 = vmatpush.msra.mxu0 %v298
        %386 = vmatpush.msra.mxu0 %v297
        %387 = vmatpush.msra.mxu0 %v296
        %388 = vmatpush.msra.mxu0 %v295
        %389 = vmatpush.msra.mxu0 %v294
        %390 = vmatpush.msra.mxu0 %v293
        %391 = vmatpush.msra.mxu0 %v292
        %392 = vmatpush.msra.mxu0 %v291
        %393 = vmatpush.msra.mxu0 %v290
        %394 = vmatpush.msra.mxu0 %v289
        %395 = vmatmul.f32.gmra.mxu0 %v229
        %v396 = vpop.f32.mrf.mxu0
        %v397 = vadd.f32 %v368, %v396
        %398 = vmatmul.f32.gmra.mxu0 %v230
        %v399 = vpop.f32.mrf.mxu0
        %v400 = vadd.f32 %v371, %v399
        %401 = vmatmul.f32.gmra.mxu0 %v231
        %v402 = vpop.f32.mrf.mxu0
        %v403 = vadd.f32 %v374, %v402
        %404 = vmatmul.f32.gmra.mxu0 %v232
        %v405 = vpop.f32.mrf.mxu0
        %v406 = vadd.f32 %v377, %v405
        %407 = vdwg.mxu0
        %408 = vmatpush.msra.mxu0 %v320
        %409 = vmatpush.msra.mxu0 %v319
        %410 = vmatpush.msra.mxu0 %v318
        %411 = vmatpush.msra.mxu0 %v317
        %412 = vmatpush.msra.mxu0 %v316
        %413 = vmatpush.msra.mxu0 %v315
        %414 = vmatpush.msra.mxu0 %v314
        %415 = vmatpush.msra.mxu0 %v313
        %416 = vmatpush.msra.mxu0 %v312
        %417 = vmatpush.msra.mxu0 %v311
        %418 = vmatpush.msra.mxu0 %v310
        %419 = vmatpush.msra.mxu0 %v309
        %420 = vmatpush.msra.mxu0 %v308
        %421 = vmatpush.msra.mxu0 %v307
        %422 = vmatpush.msra.mxu0 %v306
        %423 = vmatpush.msra.mxu0 %v305
        %424 = vmatmul.f32.gmra.mxu0 %v183
        %v425 = vpop.f32.mrf.mxu0
        %v426 = vadd.f32 %v397, %v425
        %427 = vmatmul.f32.gmra.mxu0 %v184
        %v428 = vpop.f32.mrf.mxu0
        %v429 = vadd.f32 %v400, %v428
        %430 = vmatmul.f32.gmra.mxu0 %v185
        %v431 = vpop.f32.mrf.mxu0
        %v432 = vadd.f32 %v403, %v431
        %433 = vmatmul.f32.gmra.mxu0 %v186
        %v434 = vpop.f32.mrf.mxu0
        %v435 = vadd.f32 %v406, %v434
        %436 = vdwg.mxu0
        %437 = vst [vmem:[%s173] sm:$0xff] %v426
        %438 = vst [vmem:[%s173 + $0x8] sm:$0xff] %v429
        %439 = vst [vmem:[%s173 + $0x10] sm:$0xff] %v432
        %440 = vst [vmem:[%s173 + $0x18] sm:$0xff] %v435
        %s441 = scalar_lea.vmem %s1, 512
        %v442 = vld [vmem:[%s441] sm:$0xff]
        %v443 = vld [vmem:[%s441 + $0x8] sm:$0xff]
        %v444 = vld [vmem:[%s441 + $0x10] sm:$0xff]
        %v445 = vld [vmem:[%s441 + $0x18] sm:$0xff]
        %v446 = vld [vmem:[%s441 + $0x20] sm:$0xff]
        %v447 = vld [vmem:[%s441 + $0x28] sm:$0xff]
        %v448 = vld [vmem:[%s441 + $0x30] sm:$0xff]
        %v449 = vld [vmem:[%s441 + $0x38] sm:$0xff]
        %v450 = vld [vmem:[%s441 + $0x40] sm:$0xff]
        %v451 = vld [vmem:[%s441 + $0x48] sm:$0xff]
        %v452 = vld [vmem:[%s441 + $0x50] sm:$0xff]
        %v453 = vld [vmem:[%s441 + $0x58] sm:$0xff]
        %v454 = vld [vmem:[%s441 + $0x60] sm:$0xff]
        %v455 = vld [vmem:[%s441 + $0x68] sm:$0xff]
        %v456 = vld [vmem:[%s441 + $0x70] sm:$0xff]
        %v457 = vld [vmem:[%s441 + $0x78] sm:$0xff]
        %v458 = vld [vmem:[%s441 + $0x80] sm:$0xff]
        %v459 = vld [vmem:[%s441 + $0x88] sm:$0xff]
        %v460 = vld [vmem:[%s441 + $0x90] sm:$0xff]
        %v461 = vld [vmem:[%s441 + $0x98] sm:$0xff]
        %v462 = vld [vmem:[%s441 + $0xa0] sm:$0xff]
        %v463 = vld [vmem:[%s441 + $0xa8] sm:$0xff]
        %v464 = vld [vmem:[%s441 + $0xb0] sm:$0xff]
        %v465 = vld [vmem:[%s441 + $0xb8] sm:$0xff]
        %v466 = vld [vmem:[%s441 + $0xc0] sm:$0xff]
        %v467 = vld [vmem:[%s441 + $0xc8] sm:$0xff]
        %v468 = vld [vmem:[%s441 + $0xd0] sm:$0xff]
        %v469 = vld [vmem:[%s441 + $0xd8] sm:$0xff]
        %v470 = vld [vmem:[%s441 + $0xe0] sm:$0xff]
        %v471 = vld [vmem:[%s441 + $0xe8] sm:$0xff]
        %v472 = vld [vmem:[%s441 + $0xf0] sm:$0xff]
        %v473 = vld [vmem:[%s441 + $0xf8] sm:$0xff]
        %v474 = vld [vmem:[%s441 + $0x100] sm:$0xff]
        %v475 = vld [vmem:[%s441 + $0x108] sm:$0xff]
        %v476 = vld [vmem:[%s441 + $0x110] sm:$0xff]
        %v477 = vld [vmem:[%s441 + $0x118] sm:$0xff]
        %v478 = vld [vmem:[%s441 + $0x120] sm:$0xff]
        %v479 = vld [vmem:[%s441 + $0x128] sm:$0xff]
        %v480 = vld [vmem:[%s441 + $0x130] sm:$0xff]
        %v481 = vld [vmem:[%s441 + $0x138] sm:$0xff]
        %v482 = vld [vmem:[%s441 + $0x140] sm:$0xff]
        %v483 = vld [vmem:[%s441 + $0x148] sm:$0xff]
        %v484 = vld [vmem:[%s441 + $0x150] sm:$0xff]
        %v485 = vld [vmem:[%s441 + $0x158] sm:$0xff]
        %v486 = vld [vmem:[%s441 + $0x160] sm:$0xff]
        %v487 = vld [vmem:[%s441 + $0x168] sm:$0xff]
        %v488 = vld [vmem:[%s441 + $0x170] sm:$0xff]
        %v489 = vld [vmem:[%s441 + $0x178] sm:$0xff]
        %v490 = vld [vmem:[%s441 + $0x180] sm:$0xff]
        %v491 = vld [vmem:[%s441 + $0x188] sm:$0xff]
        %v492 = vld [vmem:[%s441 + $0x190] sm:$0xff]
        %v493 = vld [vmem:[%s441 + $0x198] sm:$0xff]
        %v494 = vld [vmem:[%s441 + $0x1a0] sm:$0xff]
        %v495 = vld [vmem:[%s441 + $0x1a8] sm:$0xff]
        %v496 = vld [vmem:[%s441 + $0x1b0] sm:$0xff]
        %v497 = vld [vmem:[%s441 + $0x1b8] sm:$0xff]
        %v498 = vld [vmem:[%s441 + $0x1c0] sm:$0xff]
        %v499 = vld [vmem:[%s441 + $0x1c8] sm:$0xff]
        %v500 = vld [vmem:[%s441 + $0x1d0] sm:$0xff]
        %v501 = vld [vmem:[%s441 + $0x1d8] sm:$0xff]
        %v502 = vld [vmem:[%s441 + $0x1e0] sm:$0xff]
        %v503 = vld [vmem:[%s441 + $0x1e8] sm:$0xff]
        %v504 = vld [vmem:[%s441 + $0x1f0] sm:$0xff]
        %v505 = vld [vmem:[%s441 + $0x1f8] sm:$0xff]
        %506 = vmatpush.msra.mxu0 %v457
        %507 = vmatpush.msra.mxu0 %v456
        %508 = vmatpush.msra.mxu0 %v455
        %509 = vmatpush.msra.mxu0 %v454
        %510 = vmatpush.msra.mxu0 %v453
        %511 = vmatpush.msra.mxu0 %v452
        %512 = vmatpush.msra.mxu0 %v451
        %513 = vmatpush.msra.mxu0 %v450
        %514 = vmatpush.msra.mxu0 %v449
        %515 = vmatpush.msra.mxu0 %v448
        %516 = vmatpush.msra.mxu0 %v447
        %517 = vmatpush.msra.mxu0 %v446
        %518 = vmatpush.msra.mxu0 %v445
        %519 = vmatpush.msra.mxu0 %v444
        %520 = vmatpush.msra.mxu0 %v443
        %521 = vmatpush.msra.mxu0 %v442
        %522 = vmatmul.f32.gmra.mxu0 %v203
        %v523 = vpop.f32.mrf.mxu0
        %v524 = vadd.f32 %v255, %v523
        %525 = vmatmul.f32.gmra.mxu0 %v183
        %v526 = vpop.f32.mrf.mxu0
        %v527 = vadd.f32 %v255, %v526
        %528 = vmatmul.f32.gmra.mxu0 %v184
        %v529 = vpop.f32.mrf.mxu0
        %v530 = vadd.f32 %v255, %v529
        %531 = vmatmul.f32.gmra.mxu0 %v185
        %v532 = vpop.f32.mrf.mxu0
        %v533 = vadd.f32 %v255, %v532
        %534 = vdwg.mxu0
        %535 = vmatpush.msra.mxu0 %v473
        %536 = vmatpush.msra.mxu0 %v472
        %537 = vmatpush.msra.mxu0 %v471
        %538 = vmatpush.msra.mxu0 %v470
        %539 = vmatpush.msra.mxu0 %v469
        %540 = vmatpush.msra.mxu0 %v468
        %541 = vmatpush.msra.mxu0 %v467
        %542 = vmatpush.msra.mxu0 %v466
        %543 = vmatpush.msra.mxu0 %v465
        %544 = vmatpush.msra.mxu0 %v464
        %545 = vmatpush.msra.mxu0 %v463
        %546 = vmatpush.msra.mxu0 %v462
        %547 = vmatpush.msra.mxu0 %v461
        %548 = vmatpush.msra.mxu0 %v460
        %549 = vmatpush.msra.mxu0 %v459
        %550 = vmatpush.msra.mxu0 %v458
        %551 = vmatmul.f32.gmra.mxu0 %v247
        %v552 = vpop.f32.mrf.mxu0
        %v553 = vadd.f32 %v524, %v552
        %554 = vmatmul.f32.gmra.mxu0 %v248
        %v555 = vpop.f32.mrf.mxu0
        %v556 = vadd.f32 %v527, %v555
        %557 = vmatmul.f32.gmra.mxu0 %v249
        %v558 = vpop.f32.mrf.mxu0
        %v559 = vadd.f32 %v530, %v558
        %560 = vmatmul.f32.gmra.mxu0 %v250
        %v561 = vpop.f32.mrf.mxu0
        %v562 = vadd.f32 %v533, %v561
        %563 = vdwg.mxu0
        %564 = vmatpush.msra.mxu0 %v489
        %565 = vmatpush.msra.mxu0 %v488
        %566 = vmatpush.msra.mxu0 %v487
        %567 = vmatpush.msra.mxu0 %v486
        %568 = vmatpush.msra.mxu0 %v485
        %569 = vmatpush.msra.mxu0 %v484
        %570 = vmatpush.msra.mxu0 %v483
        %571 = vmatpush.msra.mxu0 %v482
        %572 = vmatpush.msra.mxu0 %v481
        %573 = vmatpush.msra.mxu0 %v480
        %574 = vmatpush.msra.mxu0 %v479
        %575 = vmatpush.msra.mxu0 %v478
        %576 = vmatpush.msra.mxu0 %v477
        %577 = vmatpush.msra.mxu0 %v476
        %578 = vmatpush.msra.mxu0 %v475
        %579 = vmatpush.msra.mxu0 %v474
        %580 = vmatmul.f32.gmra.mxu0 %v183
        %v581 = vpop.f32.mrf.mxu0
        %v582 = vadd.f32 %v553, %v581
        %583 = vmatmul.f32.gmra.mxu0 %v184
        %v584 = vpop.f32.mrf.mxu0
        %v585 = vadd.f32 %v556, %v584
        %586 = vmatmul.f32.gmra.mxu0 %v185
        %v587 = vpop.f32.mrf.mxu0
        %v588 = vadd.f32 %v559, %v587
        %589 = vmatmul.f32.gmra.mxu0 %v186
        %v590 = vpop.f32.mrf.mxu0
        %v591 = vadd.f32 %v562, %v590
        %592 = vdwg.mxu0
        %593 = vmatpush.msra.mxu0 %v505
        %594 = vmatpush.msra.mxu0 %v504
        %595 = vmatpush.msra.mxu0 %v503
        %596 = vmatpush.msra.mxu0 %v502
        %597 = vmatpush.msra.mxu0 %v501
        %598 = vmatpush.msra.mxu0 %v500
        %599 = vmatpush.msra.mxu0 %v499
        %600 = vmatpush.msra.mxu0 %v498
        %601 = vmatpush.msra.mxu0 %v497
        %602 = vmatpush.msra.mxu0 %v496
        %603 = vmatpush.msra.mxu0 %v495
        %604 = vmatpush.msra.mxu0 %v494
        %605 = vmatpush.msra.mxu0 %v493
        %606 = vmatpush.msra.mxu0 %v492
        %607 = vmatpush.msra.mxu0 %v491
        %608 = vmatpush.msra.mxu0 %v490
        %609 = vmatmul.f32.gmra.mxu0 %v248
        %v610 = vpop.f32.mrf.mxu0
        %v611 = vadd.f32 %v582, %v610
        %612 = vmatmul.f32.gmra.mxu0 %v249
        %v613 = vpop.f32.mrf.mxu0
        %v614 = vadd.f32 %v585, %v613
        %615 = vmatmul.f32.gmra.mxu0 %v250
        %v616 = vpop.f32.mrf.mxu0
        %v617 = vadd.f32 %v588, %v616
        %618 = vmatmul.f32.gmra.mxu0 %v251
        %v619 = vpop.f32.mrf.mxu0
        %v620 = vadd.f32 %v591, %v619
        %621 = vdwg.mxu0
        %s622 = scalar_lea.vmem %s173, 32 [#allocation2]
        %623 = vst [vmem:[%s622] sm:$0xff] %v611
        %624 = vst [vmem:[%s622 + $0x8] sm:$0xff] %v614
        %625 = vst [vmem:[%s622 + $0x10] sm:$0xff] %v617
        %626 = vst [vmem:[%s622 + $0x18] sm:$0xff] %v620
        %s627 = scalar_lea.vmem %s1, 1024
        %v628 = vld [vmem:[%s627] sm:$0xff]
        %v629 = vld [vmem:[%s627 + $0x8] sm:$0xff]
        %v630 = vld [vmem:[%s627 + $0x10] sm:$0xff]
        %v631 = vld [vmem:[%s627 + $0x18] sm:$0xff]
        %v632 = vld [vmem:[%s627 + $0x20] sm:$0xff]
        %v633 = vld [vmem:[%s627 + $0x28] sm:$0xff]
        %v634 = vld [vmem:[%s627 + $0x30] sm:$0xff]
        %v635 = vld [vmem:[%s627 + $0x38] sm:$0xff]
        %v636 = vld [vmem:[%s627 + $0x40] sm:$0xff]
        %v637 = vld [vmem:[%s627 + $0x48] sm:$0xff]
        %v638 = vld [vmem:[%s627 + $0x50] sm:$0xff]
        %v639 = vld [vmem:[%s627 + $0x58] sm:$0xff]
        %v640 = vld [vmem:[%s627 + $0x60] sm:$0xff]
        %v641 = vld [vmem:[%s627 + $0x68] sm:$0xff]
        %v642 = vld [vmem:[%s627 + $0x70] sm:$0xff]
        %v643 = vld [vmem:[%s627 + $0x78] sm:$0xff]
        %v644 = vld [vmem:[%s627 + $0x80] sm:$0xff]
        %v645 = vld [vmem:[%s627 + $0x88] sm:$0xff]
        %v646 = vld [vmem:[%s627 + $0x90] sm:$0xff]
        %v647 = vld [vmem:[%s627 + $0x98] sm:$0xff]
        %v648 = vld [vmem:[%s627 + $0xa0] sm:$0xff]
        %v649 = vld [vmem:[%s627 + $0xa8] sm:$0xff]
        %v650 = vld [vmem:[%s627 + $0xb0] sm:$0xff]
        %v651 = vld [vmem:[%s627 + $0xb8] sm:$0xff]
        %v652 = vld [vmem:[%s627 + $0xc0] sm:$0xff]
        %v653 = vld [vmem:[%s627 + $0xc8] sm:$0xff]
        %v654 = vld [vmem:[%s627 + $0xd0] sm:$0xff]
        %v655 = vld [vmem:[%s627 + $0xd8] sm:$0xff]
        %v656 = vld [vmem:[%s627 + $0xe0] sm:$0xff]
        %v657 = vld [vmem:[%s627 + $0xe8] sm:$0xff]
        %v658 = vld [vmem:[%s627 + $0xf0] sm:$0xff]
        %v659 = vld [vmem:[%s627 + $0xf8] sm:$0xff]
        %v660 = vld [vmem:[%s627 + $0x100] sm:$0xff]
        %v661 = vld [vmem:[%s627 + $0x108] sm:$0xff]
        %v662 = vld [vmem:[%s627 + $0x110] sm:$0xff]
        %v663 = vld [vmem:[%s627 + $0x118] sm:$0xff]
        %v664 = vld [vmem:[%s627 + $0x120] sm:$0xff]
        %v665 = vld [vmem:[%s627 + $0x128] sm:$0xff]
        %v666 = vld [vmem:[%s627 + $0x130] sm:$0xff]
        %v667 = vld [vmem:[%s627 + $0x138] sm:$0xff]
        %v668 = vld [vmem:[%s627 + $0x140] sm:$0xff]
        %v669 = vld [vmem:[%s627 + $0x148] sm:$0xff]
        %v670 = vld [vmem:[%s627 + $0x150] sm:$0xff]
        %v671 = vld [vmem:[%s627 + $0x158] sm:$0xff]
        %v672 = vld [vmem:[%s627 + $0x160] sm:$0xff]
        %v673 = vld [vmem:[%s627 + $0x168] sm:$0xff]
        %v674 = vld [vmem:[%s627 + $0x170] sm:$0xff]
        %v675 = vld [vmem:[%s627 + $0x178] sm:$0xff]
        %v676 = vld [vmem:[%s627 + $0x180] sm:$0xff]
        %v677 = vld [vmem:[%s627 + $0x188] sm:$0xff]
        %v678 = vld [vmem:[%s627 + $0x190] sm:$0xff]
        %v679 = vld [vmem:[%s627 + $0x198] sm:$0xff]
        %v680 = vld [vmem:[%s627 + $0x1a0] sm:$0xff]
        %v681 = vld [vmem:[%s627 + $0x1a8] sm:$0xff]
        %v682 = vld [vmem:[%s627 + $0x1b0] sm:$0xff]
        %v683 = vld [vmem:[%s627 + $0x1b8] sm:$0xff]
        %v684 = vld [vmem:[%s627 + $0x1c0] sm:$0xff]
        %v685 = vld [vmem:[%s627 + $0x1c8] sm:$0xff]
        %v686 = vld [vmem:[%s627 + $0x1d0] sm:$0xff]
        %v687 = vld [vmem:[%s627 + $0x1d8] sm:$0xff]
        %v688 = vld [vmem:[%s627 + $0x1e0] sm:$0xff]
        %v689 = vld [vmem:[%s627 + $0x1e8] sm:$0xff]
        %v690 = vld [vmem:[%s627 + $0x1f0] sm:$0xff]
        %v691 = vld [vmem:[%s627 + $0x1f8] sm:$0xff]
        %692 = vmatpush.msra.mxu0 %v643
        %693 = vmatpush.msra.mxu0 %v642
        %694 = vmatpush.msra.mxu0 %v641
        %695 = vmatpush.msra.mxu0 %v640
        %696 = vmatpush.msra.mxu0 %v639
        %697 = vmatpush.msra.mxu0 %v638
        %698 = vmatpush.msra.mxu0 %v637
        %699 = vmatpush.msra.mxu0 %v636
        %700 = vmatpush.msra.mxu0 %v635
        %701 = vmatpush.msra.mxu0 %v634
        %702 = vmatpush.msra.mxu0 %v633
        %703 = vmatpush.msra.mxu0 %v632
        %704 = vmatpush.msra.mxu0 %v631
        %705 = vmatpush.msra.mxu0 %v630
        %706 = vmatpush.msra.mxu0 %v629
        %707 = vmatpush.msra.mxu0 %v628
        %708 = vmatmul.f32.gmra.mxu0 %v229
        %v709 = vpop.f32.mrf.mxu0
        %v710 = vadd.f32 %v255, %v709
        %711 = vmatmul.f32.gmra.mxu0 %v230
        %v712 = vpop.f32.mrf.mxu0
        %v713 = vadd.f32 %v255, %v712
        %714 = vmatmul.f32.gmra.mxu0 %v231
        %v715 = vpop.f32.mrf.mxu0
        %v716 = vadd.f32 %v255, %v715
        %717 = vmatmul.f32.gmra.mxu0 %v232
        %v718 = vpop.f32.mrf.mxu0
        %v719 = vadd.f32 %v255, %v718
        %720 = vdwg.mxu0
        %721 = vmatpush.msra.mxu0 %v659
        %722 = vmatpush.msra.mxu0 %v658
        %723 = vmatpush.msra.mxu0 %v657
        %724 = vmatpush.msra.mxu0 %v656
        %725 = vmatpush.msra.mxu0 %v655
        %726 = vmatpush.msra.mxu0 %v654
        %727 = vmatpush.msra.mxu0 %v653
        %728 = vmatpush.msra.mxu0 %v652
        %729 = vmatpush.msra.mxu0 %v651
        %730 = vmatpush.msra.mxu0 %v650
        %731 = vmatpush.msra.mxu0 %v649
        %732 = vmatpush.msra.mxu0 %v648
        %733 = vmatpush.msra.mxu0 %v647
        %734 = vmatpush.msra.mxu0 %v646
        %735 = vmatpush.msra.mxu0 %v645
        %736 = vmatpush.msra.mxu0 %v644
        %737 = vmatmul.f32.gmra.mxu0 %v183
        %v738 = vpop.f32.mrf.mxu0
        %v739 = vadd.f32 %v710, %v738
        %740 = vmatmul.f32.gmra.mxu0 %v184
        %v741 = vpop.f32.mrf.mxu0
        %v742 = vadd.f32 %v713, %v741
        %743 = vmatmul.f32.gmra.mxu0 %v185
        %v744 = vpop.f32.mrf.mxu0
        %v745 = vadd.f32 %v716, %v744
        %746 = vmatmul.f32.gmra.mxu0 %v186
        %v747 = vpop.f32.mrf.mxu0
        %v748 = vadd.f32 %v719, %v747
        %749 = vdwg.mxu0
        %750 = vmatpush.msra.mxu0 %v675
        %751 = vmatpush.msra.mxu0 %v674
        %752 = vmatpush.msra.mxu0 %v673
        %753 = vmatpush.msra.mxu0 %v672
        %754 = vmatpush.msra.mxu0 %v671
        %755 = vmatpush.msra.mxu0 %v670
        %756 = vmatpush.msra.mxu0 %v669
        %757 = vmatpush.msra.mxu0 %v668
        %758 = vmatpush.msra.mxu0 %v667
        %759 = vmatpush.msra.mxu0 %v666
        %760 = vmatpush.msra.mxu0 %v665
        %761 = vmatpush.msra.mxu0 %v664
        %762 = vmatpush.msra.mxu0 %v663
        %763 = vmatpush.msra.mxu0 %v662
        %764 = vmatpush.msra.mxu0 %v661
        %765 = vmatpush.msra.mxu0 %v660
        %766 = vmatmul.f32.gmra.mxu0 %v230
        %v767 = vpop.f32.mrf.mxu0
        %v768 = vadd.f32 %v739, %v767
        %769 = vmatmul.f32.gmra.mxu0 %v231
        %v770 = vpop.f32.mrf.mxu0
        %v771 = vadd.f32 %v742, %v770
        %772 = vmatmul.f32.gmra.mxu0 %v232
        %v773 = vpop.f32.mrf.mxu0
        %v774 = vadd.f32 %v745, %v773
        %775 = vmatmul.f32.gmra.mxu0 %v233
        %v776 = vpop.f32.mrf.mxu0
        %v777 = vadd.f32 %v748, %v776
        %778 = vdwg.mxu0
        %779 = vmatpush.msra.mxu0 %v691
        %780 = vmatpush.msra.mxu0 %v690
        %781 = vmatpush.msra.mxu0 %v689
        %782 = vmatpush.msra.mxu0 %v688
        %783 = vmatpush.msra.mxu0 %v687
        %784 = vmatpush.msra.mxu0 %v686
        %785 = vmatpush.msra.mxu0 %v685
        %786 = vmatpush.msra.mxu0 %v684
        %787 = vmatpush.msra.mxu0 %v683
        %788 = vmatpush.msra.mxu0 %v682
        %789 = vmatpush.msra.mxu0 %v681
        %790 = vmatpush.msra.mxu0 %v680
        %791 = vmatpush.msra.mxu0 %v679
        %792 = vmatpush.msra.mxu0 %v678
        %793 = vmatpush.msra.mxu0 %v677
        %794 = vmatpush.msra.mxu0 %v676
        %795 = vmatmul.f32.gmra.mxu0 %v184
        %v796 = vpop.f32.mrf.mxu0
        %v797 = vadd.f32 %v768, %v796
        %798 = vmatmul.f32.gmra.mxu0 %v185
        %v799 = vpop.f32.mrf.mxu0
        %v800 = vadd.f32 %v771, %v799
        %801 = vmatmul.f32.gmra.mxu0 %v186
        %v802 = vpop.f32.mrf.mxu0
        %v803 = vadd.f32 %v774, %v802
        %804 = vmatmul.f32.gmra.mxu0 %v208
        %v805 = vpop.f32.mrf.mxu0
        %v806 = vadd.f32 %v777, %v805
        %807 = vdwg.mxu0
        %s808 = scalar_lea.vmem %s173, 64 [#allocation2]
        %809 = vst [vmem:[%s808] sm:$0xff] %v797
        %810 = vst [vmem:[%s808 + $0x8] sm:$0xff] %v800
        %811 = vst [vmem:[%s808 + $0x10] sm:$0xff] %v803
        %812 = vst [vmem:[%s808 + $0x18] sm:$0xff] %v806
        %s813 = scalar_lea.vmem %s1, 1536
        %v814 = vld [vmem:[%s813] sm:$0xff]
        %v815 = vld [vmem:[%s813 + $0x8] sm:$0xff]
        %v816 = vld [vmem:[%s813 + $0x10] sm:$0xff]
        %v817 = vld [vmem:[%s813 + $0x18] sm:$0xff]
        %v818 = vld [vmem:[%s813 + $0x20] sm:$0xff]
        %v819 = vld [vmem:[%s813 + $0x28] sm:$0xff]
        %v820 = vld [vmem:[%s813 + $0x30] sm:$0xff]
        %v821 = vld [vmem:[%s813 + $0x38] sm:$0xff]
        %v822 = vld [vmem:[%s813 + $0x40] sm:$0xff]
        %v823 = vld [vmem:[%s813 + $0x48] sm:$0xff]
        %v824 = vld [vmem:[%s813 + $0x50] sm:$0xff]
        %v825 = vld [vmem:[%s813 + $0x58] sm:$0xff]
        %v826 = vld [vmem:[%s813 + $0x60] sm:$0xff]
        %v827 = vld [vmem:[%s813 + $0x68] sm:$0xff]
        %v828 = vld [vmem:[%s813 + $0x70] sm:$0xff]
        %v829 = vld [vmem:[%s813 + $0x78] sm:$0xff]
        %v830 = vld [vmem:[%s813 + $0x80] sm:$0xff]
        %v831 = vld [vmem:[%s813 + $0x88] sm:$0xff]
        %v832 = vld [vmem:[%s813 + $0x90] sm:$0xff]
        %v833 = vld [vmem:[%s813 + $0x98] sm:$0xff]
        %v834 = vld [vmem:[%s813 + $0xa0] sm:$0xff]
        %v835 = vld [vmem:[%s813 + $0xa8] sm:$0xff]
        %v836 = vld [vmem:[%s813 + $0xb0] sm:$0xff]
        %v837 = vld [vmem:[%s813 + $0xb8] sm:$0xff]
        %v838 = vld [vmem:[%s813 + $0xc0] sm:$0xff]
        %v839 = vld [vmem:[%s813 + $0xc8] sm:$0xff]
        %v840 = vld [vmem:[%s813 + $0xd0] sm:$0xff]
        %v841 = vld [vmem:[%s813 + $0xd8] sm:$0xff]
        %v842 = vld [vmem:[%s813 + $0xe0] sm:$0xff]
        %v843 = vld [vmem:[%s813 + $0xe8] sm:$0xff]
        %v844 = vld [vmem:[%s813 + $0xf0] sm:$0xff]
        %v845 = vld [vmem:[%s813 + $0xf8] sm:$0xff]
        %v846 = vld [vmem:[%s813 + $0x100] sm:$0xff]
        %v847 = vld [vmem:[%s813 + $0x108] sm:$0xff]
        %v848 = vld [vmem:[%s813 + $0x110] sm:$0xff]
        %v849 = vld [vmem:[%s813 + $0x118] sm:$0xff]
        %v850 = vld [vmem:[%s813 + $0x120] sm:$0xff]
        %v851 = vld [vmem:[%s813 + $0x128] sm:$0xff]
        %v852 = vld [vmem:[%s813 + $0x130] sm:$0xff]
        %v853 = vld [vmem:[%s813 + $0x138] sm:$0xff]
        %v854 = vld [vmem:[%s813 + $0x140] sm:$0xff]
        %v855 = vld [vmem:[%s813 + $0x148] sm:$0xff]
        %v856 = vld [vmem:[%s813 + $0x150] sm:$0xff]
        %v857 = vld [vmem:[%s813 + $0x158] sm:$0xff]
        %v858 = vld [vmem:[%s813 + $0x160] sm:$0xff]
        %v859 = vld [vmem:[%s813 + $0x168] sm:$0xff]
        %v860 = vld [vmem:[%s813 + $0x170] sm:$0xff]
        %v861 = vld [vmem:[%s813 + $0x178] sm:$0xff]
        %v862 = vld [vmem:[%s813 + $0x180] sm:$0xff]
        %v863 = vld [vmem:[%s813 + $0x188] sm:$0xff]
        %v864 = vld [vmem:[%s813 + $0x190] sm:$0xff]
        %v865 = vld [vmem:[%s813 + $0x198] sm:$0xff]
        %v866 = vld [vmem:[%s813 + $0x1a0] sm:$0xff]
        %v867 = vld [vmem:[%s813 + $0x1a8] sm:$0xff]
        %v868 = vld [vmem:[%s813 + $0x1b0] sm:$0xff]
        %v869 = vld [vmem:[%s813 + $0x1b8] sm:$0xff]
        %v870 = vld [vmem:[%s813 + $0x1c0] sm:$0xff]
        %v871 = vld [vmem:[%s813 + $0x1c8] sm:$0xff]
        %v872 = vld [vmem:[%s813 + $0x1d0] sm:$0xff]
        %v873 = vld [vmem:[%s813 + $0x1d8] sm:$0xff]
        %v874 = vld [vmem:[%s813 + $0x1e0] sm:$0xff]
        %v875 = vld [vmem:[%s813 + $0x1e8] sm:$0xff]
        %v876 = vld [vmem:[%s813 + $0x1f0] sm:$0xff]
        %v877 = vld [vmem:[%s813 + $0x1f8] sm:$0xff]
        %878 = vmatpush.msra.mxu0 %v829
        %879 = vmatpush.msra.mxu0 %v828
        %880 = vmatpush.msra.mxu0 %v827
        %881 = vmatpush.msra.mxu0 %v826
        %882 = vmatpush.msra.mxu0 %v825
        %883 = vmatpush.msra.mxu0 %v824
        %884 = vmatpush.msra.mxu0 %v823
        %885 = vmatpush.msra.mxu0 %v822
        %886 = vmatpush.msra.mxu0 %v821
        %887 = vmatpush.msra.mxu0 %v820
        %888 = vmatpush.msra.mxu0 %v819
        %889 = vmatpush.msra.mxu0 %v818
        %890 = vmatpush.msra.mxu0 %v817
        %891 = vmatpush.msra.mxu0 %v816
        %892 = vmatpush.msra.mxu0 %v815
        %893 = vmatpush.msra.mxu0 %v814
        %894 = vmatmul.f32.gmra.mxu0 %v183
        %v895 = vpop.f32.mrf.mxu0
        %v896 = vadd.f32 %v255, %v895
        %897 = vmatmul.f32.gmra.mxu0 %v184
        %v898 = vpop.f32.mrf.mxu0
        %v899 = vadd.f32 %v255, %v898
        %900 = vmatmul.f32.gmra.mxu0 %v185
        %v901 = vpop.f32.mrf.mxu0
        %v902 = vadd.f32 %v255, %v901
        %903 = vmatmul.f32.gmra.mxu0 %v186
        %v904 = vpop.f32.mrf.mxu0
        %v905 = vadd.f32 %v255, %v904
        %906 = vdwg.mxu0
        %907 = vmatpush.msra.mxu0 %v845
        %908 = vmatpush.msra.mxu0 %v844
        %909 = vmatpush.msra.mxu0 %v843
        %910 = vmatpush.msra.mxu0 %v842
        %911 = vmatpush.msra.mxu0 %v841
        %912 = vmatpush.msra.mxu0 %v840
        %913 = vmatpush.msra.mxu0 %v839
        %914 = vmatpush.msra.mxu0 %v838
        %915 = vmatpush.msra.mxu0 %v837
        %916 = vmatpush.msra.mxu0 %v836
        %917 = vmatpush.msra.mxu0 %v835
        %918 = vmatpush.msra.mxu0 %v834
        %919 = vmatpush.msra.mxu0 %v833
        %920 = vmatpush.msra.mxu0 %v832
        %921 = vmatpush.msra.mxu0 %v831
        %922 = vmatpush.msra.mxu0 %v830
        %923 = vmatmul.f32.gmra.mxu0 %v248
        %v924 = vpop.f32.mrf.mxu0
        %v925 = vadd.f32 %v896, %v924
        %926 = vmatmul.f32.gmra.mxu0 %v249
        %v927 = vpop.f32.mrf.mxu0
        %v928 = vadd.f32 %v899, %v927
        %929 = vmatmul.f32.gmra.mxu0 %v250
        %v930 = vpop.f32.mrf.mxu0
        %v931 = vadd.f32 %v902, %v930
        %932 = vmatmul.f32.gmra.mxu0 %v251
        %v933 = vpop.f32.mrf.mxu0
        %v934 = vadd.f32 %v905, %v933
        %935 = vdwg.mxu0
        %936 = vmatpush.msra.mxu0 %v861
        %937 = vmatpush.msra.mxu0 %v860
        %938 = vmatpush.msra.mxu0 %v859
        %939 = vmatpush.msra.mxu0 %v858
        %940 = vmatpush.msra.mxu0 %v857
        %941 = vmatpush.msra.mxu0 %v856
        %942 = vmatpush.msra.mxu0 %v855
        %943 = vmatpush.msra.mxu0 %v854
        %944 = vmatpush.msra.mxu0 %v853
        %945 = vmatpush.msra.mxu0 %v852
        %946 = vmatpush.msra.mxu0 %v851
        %947 = vmatpush.msra.mxu0 %v850
        %948 = vmatpush.msra.mxu0 %v849
        %949 = vmatpush.msra.mxu0 %v848
        %950 = vmatpush.msra.mxu0 %v847
        %951 = vmatpush.msra.mxu0 %v846
        %952 = vmatmul.f32.gmra.mxu0 %v184
        %v953 = vpop.f32.mrf.mxu0
        %v954 = vadd.f32 %v925, %v953
        %955 = vmatmul.f32.gmra.mxu0 %v185
        %v956 = vpop.f32.mrf.mxu0
        %v957 = vadd.f32 %v928, %v956
        %958 = vmatmul.f32.gmra.mxu0 %v186
        %v959 = vpop.f32.mrf.mxu0
        %v960 = vadd.f32 %v931, %v959
        %961 = vmatmul.f32.gmra.mxu0 %v208
        %v962 = vpop.f32.mrf.mxu0
        %v963 = vadd.f32 %v934, %v962
        %964 = vdwg.mxu0
        %965 = vmatpush.msra.mxu0 %v877
        %966 = vmatpush.msra.mxu0 %v876
        %967 = vmatpush.msra.mxu0 %v875
        %968 = vmatpush.msra.mxu0 %v874
        %969 = vmatpush.msra.mxu0 %v873
        %970 = vmatpush.msra.mxu0 %v872
        %971 = vmatpush.msra.mxu0 %v871
        %972 = vmatpush.msra.mxu0 %v870
        %973 = vmatpush.msra.mxu0 %v869
        %974 = vmatpush.msra.mxu0 %v868
        %975 = vmatpush.msra.mxu0 %v867
        %976 = vmatpush.msra.mxu0 %v866
        %977 = vmatpush.msra.mxu0 %v865
        %978 = vmatpush.msra.mxu0 %v864
        %979 = vmatpush.msra.mxu0 %v863
        %980 = vmatpush.msra.mxu0 %v862
        %981 = vmatmul.f32.gmra.mxu0 %v249
        %v982 = vpop.f32.mrf.mxu0
        %v983 = vadd.f32 %v954, %v982
        %984 = vmatmul.f32.gmra.mxu0 %v250
        %v985 = vpop.f32.mrf.mxu0
        %v986 = vadd.f32 %v957, %v985
        %987 = vmatmul.f32.gmra.mxu0 %v251
        %v988 = vpop.f32.mrf.mxu0
        %v989 = vadd.f32 %v960, %v988
        %990 = vmatmul.f32.gmra.mxu0 %v252
        %v991 = vpop.f32.mrf.mxu0
        %v992 = vadd.f32 %v963, %v991
        %993 = vdwg.mxu0
        %s994 = scalar_lea.vmem %s173, 96 [#allocation2]
        %995 = vst [vmem:[%s994] sm:$0xff] %v983
        %996 = vst [vmem:[%s994 + $0x8] sm:$0xff] %v986
        %997 = vst [vmem:[%s994 + $0x10] sm:$0xff] %v989
        %998 = vst [vmem:[%s994 + $0x18] sm:$0xff] %v992
        %s999 = sand.u32 %s104, 1
        %s1000 = sand.u32 %s104, 1
        %s1001 = smul.addr %s1000, 128
        %s1002 = scalar_lea.vmem [#allocation2], %s1001
        // Predicated region
        $region33: #{_upsample_call.1} parent=31 // pred_check
          %p1003 = pneg %p114
        $region34: #{_upsample_call.1} parent=31 // pred_check_branch
          %1005 = sbr.rel (%p1003) target = $region36
        $region35: #{_upsample_call.1} parent=31 // pred_region
          %s1006 = smul.u32 4, %s19
          %s1007 = smul.addr %s18, 32
          %s1008 = sadd.s32 %s1006, %s1007
          %s1009 = smul.addr %s1008, 8
          %s1010 = scalar_lea.vmem %s3, %s1009
          // Predicated region
          $region37: #{_upsample_call.1} parent=35 // pred_check
            _
          $region38: #{_upsample_call.1} parent=35 // pred_check_branch
            %1012 = sbr.rel (0) target = $region40
          $region39: #{_upsample_call.1} parent=35 // pred_region
            // Predicated region
            $region41: #{_upsample_call.1} parent=39 // pred_check
              _
            $region42: #{_upsample_call.1} parent=39 // pred_check_branch
              %1014 = sbr.rel (0) target = $region44
            $region43: #{_upsample_call.1} parent=39 // pred_region
              // Predicated region
              $region56: #{_upsample_call.1} parent=43 // pred_check
                _
              $region57: #{_upsample_call.1} parent=43 // pred_check_branch
                %1060 = sbr.rel (0) target = $region59
              $region58: #{_upsample_call.1} parent=43 // pred_region
                loop: start=0, step=1, limit=1
                $region60: #{_upsample_call.1} parent=58 // loop_pre_header
                  _
                $region61: #{_upsample_call.1} parent=58 // loop_header
                  %s1062 = sphi 0, %s1066
                  %p1063 = scmp.ge.s32.totalorder %s1062, 1
                  %s1067 = sphi %s1002, %s1002
                  %s1068 = sphi %s1010, %s1010
                $region62: #{_upsample_call.1} parent=58 // loop_header_branch
                  %1065 = sbr.rel (%p1063) target = $region66
                $region63: #{_upsample_call.1} parent=58 // loop_body
                  %v1069 = vld [vmem:[%s1067] sm:$0xff]
                  %1070 = vst [vmem:[%s1068] sm:$0xff] %v1069
                  %v1071 = vld [vmem:[%s1067 + $0x8] sm:$0xff]
                  %1072 = vst [vmem:[%s1068 + $0x8] sm:$0xff] %v1071
                  %v1073 = vld [vmem:[%s1067 + $0x10] sm:$0xff]
                  %1074 = vst [vmem:[%s1068 + $0x10] sm:$0xff] %v1073
                  %v1075 = vld [vmem:[%s1067 + $0x18] sm:$0xff]
                  %1076 = vst [vmem:[%s1068 + $0x18] sm:$0xff] %v1075
                  %v1077 = vld [vmem:[%s1067 + $0x20] sm:$0xff]
                  %1078 = vst [vmem:[%s1068 + $0x40] sm:$0xff] %v1077
                  %v1079 = vld [vmem:[%s1067 + $0x28] sm:$0xff]
                  %1080 = vst [vmem:[%s1068 + $0x48] sm:$0xff] %v1079
                  %v1081 = vld [vmem:[%s1067 + $0x30] sm:$0xff]
                  %1082 = vst [vmem:[%s1068 + $0x50] sm:$0xff] %v1081
                  %v1083 = vld [vmem:[%s1067 + $0x38] sm:$0xff]
                  %1084 = vst [vmem:[%s1068 + $0x58] sm:$0xff] %v1083
                  %v1085 = vld [vmem:[%s1067 + $0x40] sm:$0xff]
                  %1086 = vst [vmem:[%s1068 + $0x80] sm:$0xff] %v1085
                  %v1087 = vld [vmem:[%s1067 + $0x48] sm:$0xff]
                  %1088 = vst [vmem:[%s1068 + $0x88] sm:$0xff] %v1087
                  %v1089 = vld [vmem:[%s1067 + $0x50] sm:$0xff]
                  %1090 = vst [vmem:[%s1068 + $0x90] sm:$0xff] %v1089
                  %v1091 = vld [vmem:[%s1067 + $0x58] sm:$0xff]
                  %1092 = vst [vmem:[%s1068 + $0x98] sm:$0xff] %v1091
                  %v1093 = vld [vmem:[%s1067 + $0x60] sm:$0xff]
                  %1094 = vst [vmem:[%s1068 + $0xc0] sm:$0xff] %v1093
                  %v1095 = vld [vmem:[%s1067 + $0x68] sm:$0xff]
                  %1096 = vst [vmem:[%s1068 + $0xc8] sm:$0xff] %v1095
                  %v1097 = vld [vmem:[%s1067 + $0x70] sm:$0xff]
                  %1098 = vst [vmem:[%s1068 + $0xd0] sm:$0xff] %v1097
                  %v1099 = vld [vmem:[%s1067 + $0x78] sm:$0xff]
                  %1100 = vst [vmem:[%s1068 + $0xd8] sm:$0xff] %v1099
                $region64: #{_upsample_call.1} parent=58 // loop_footer
                  %s1066 = sadd.s32 1, %s1062
                $region65: #{_upsample_call.1} parent=58 // loop_footer_branch
                  %1061 = sbr.rel target = $region61
                $region66: #{_upsample_call.1} parent=58 // loop_exit
                  _
              $region59: #{_upsample_call.1} parent=43 // pred_fallthru
                _
              // Predicated region
              $region67: #{_upsample_call.1} parent=43 // pred_check
                _
              $region68: #{_upsample_call.1} parent=43 // pred_check_branch
                %1102 = sbr.rel target = $region70
              $region69: #{_upsample_call.1} parent=43 // pred_region
                _
              $region70: #{_upsample_call.1} parent=43 // pred_fallthru
                _
            $region44: #{_upsample_call.1} parent=39 // pred_fallthru
              _
            // Predicated region
            $region45: #{_upsample_call.1} parent=39 // pred_check
              _
            $region46: #{_upsample_call.1} parent=39 // pred_check_branch
              %1016 = sbr.rel target = $region48
            $region47: #{_upsample_call.1} parent=39 // pred_region
              %s1018 = ssub.s32 256, 1
              loop: start=0, step=1, limit=1
              $region49: #{_upsample_call.1} parent=47 // loop_pre_header
                _
              $region50: #{_upsample_call.1} parent=47 // loop_header
                %s1020 = sphi 0, %s1024
                %p1021 = scmp.ge.s32.totalorder %s1020, 1
                %s1025 = sphi %s1002, %s1002
                %s1026 = sphi %s1010, %s1010
              $region51: #{_upsample_call.1} parent=47 // loop_header_branch
                %1023 = sbr.rel (%p1021) target = $region55
              $region52: #{_upsample_call.1} parent=47 // loop_body
                %v1027 = vld [vmem:[%s1025] sm:%s1018]
                %1028 = vst [vmem:[%s1026] sm:%s1018] %v1027
                %v1029 = vld [vmem:[%s1025 + $0x8] sm:%s1018]
                %1030 = vst [vmem:[%s1026 + $0x8] sm:%s1018] %v1029
                %v1031 = vld [vmem:[%s1025 + $0x10] sm:%s1018]
                %1032 = vst [vmem:[%s1026 + $0x10] sm:%s1018] %v1031
                %v1033 = vld [vmem:[%s1025 + $0x18] sm:%s1018]
                %1034 = vst [vmem:[%s1026 + $0x18] sm:%s1018] %v1033
                %v1035 = vld [vmem:[%s1025 + $0x20] sm:%s1018]
                %1036 = vst [vmem:[%s1026 + $0x40] sm:%s1018] %v1035
                %v1037 = vld [vmem:[%s1025 + $0x28] sm:%s1018]
                %1038 = vst [vmem:[%s1026 + $0x48] sm:%s1018] %v1037
                %v1039 = vld [vmem:[%s1025 + $0x30] sm:%s1018]
                %1040 = vst [vmem:[%s1026 + $0x50] sm:%s1018] %v1039
                %v1041 = vld [vmem:[%s1025 + $0x38] sm:%s1018]
                %1042 = vst [vmem:[%s1026 + $0x58] sm:%s1018] %v1041
                %v1043 = vld [vmem:[%s1025 + $0x40] sm:%s1018]
                %1044 = vst [vmem:[%s1026 + $0x80] sm:%s1018] %v1043
                %v1045 = vld [vmem:[%s1025 + $0x48] sm:%s1018]
                %1046 = vst [vmem:[%s1026 + $0x88] sm:%s1018] %v1045
                %v1047 = vld [vmem:[%s1025 + $0x50] sm:%s1018]
                %1048 = vst [vmem:[%s1026 + $0x90] sm:%s1018] %v1047
                %v1049 = vld [vmem:[%s1025 + $0x58] sm:%s1018]
                %1050 = vst [vmem:[%s1026 + $0x98] sm:%s1018] %v1049
                %v1051 = vld [vmem:[%s1025 + $0x60] sm:%s1018]
                %1052 = vst [vmem:[%s1026 + $0xc0] sm:%s1018] %v1051
                %v1053 = vld [vmem:[%s1025 + $0x68] sm:%s1018]
                %1054 = vst [vmem:[%s1026 + $0xc8] sm:%s1018] %v1053
                %v1055 = vld [vmem:[%s1025 + $0x70] sm:%s1018]
                %1056 = vst [vmem:[%s1026 + $0xd0] sm:%s1018] %v1055
                %v1057 = vld [vmem:[%s1025 + $0x78] sm:%s1018]
                %1058 = vst [vmem:[%s1026 + $0xd8] sm:%s1018] %v1057
              $region53: #{_upsample_call.1} parent=47 // loop_footer
                %s1024 = sadd.s32 1, %s1020
              $region54: #{_upsample_call.1} parent=47 // loop_footer_branch
                %1019 = sbr.rel target = $region50
              $region55: #{_upsample_call.1} parent=47 // loop_exit
                _
            $region48: #{_upsample_call.1} parent=39 // pred_fallthru
              _
          $region40: #{_upsample_call.1} parent=35 // pred_fallthru
            _
          %1103 = vnop
        $region36: #{_upsample_call.1} parent=31 // pred_fallthru
          _
      $region32: #{_upsample_call.1} parent=5 // pred_fallthru
        _
      %p1104 = scmp.le.s32.totalorder 2, %s9
      // Predicated region
      $region71: #{_upsample_call.1} parent=5 // pred_check
        %p1105 = pneg %p1104
      $region72: #{_upsample_call.1} parent=5 // pred_check_branch
        %1107 = sbr.rel (%p1105) target = $region74
      $region73: #{_upsample_call.1} parent=5 // pred_region
        %s1108 = ssub.s32 %s9, 2
        // Predicated region
        $region75: #{_upsample_call.1} parent=73 // pred_check
          %p1109 = pneg %p120
        $region76: #{_upsample_call.1} parent=73 // pred_check_branch
          %1111 = sbr.rel (%p1109) target = $region78
        $region77: #{_upsample_call.1} parent=73 // pred_region
          %s1112 = sand.u32 %s105, 1
          %s1113 = sand.u32 %s105, 1
          %s1114 = smul.addr %s1113, 128
          %s1115 = scalar_lea.vmem [#allocation2], %s1114
        $region78: #{_upsample_call.1} parent=73 // pred_fallthru
          _
      $region74: #{_upsample_call.1} parent=5 // pred_fallthru
        _
    $region6: #{_upsample_call.1} parent=1 // loop_footer
      %s13 = sadd.s32 1, %s9
    $region7: #{_upsample_call.1} parent=1 // loop_footer_branch
      %8 = sbr.rel target = $region3
    $region8: #{_upsample_call.1} parent=1 // loop_exit
      _

</llo_original>
